<compile_context>
chip_gen: v6e
topology: v6e:2x2x1
jax: 0.10.0
libtpu: 0.0.40
codegen_flags: <defaults>
</compile_context>

<pallas_src>
import functools

import jax
import jax.numpy as jnp
from jax import lax
from jax.experimental import pallas as pl
from jax.experimental.pallas import tpu as pltpu


def _s2fb2_kernel(x1_ref,      # (1, H, W*C)   residual / first input, lane-dense
                  x2_ref,      # (1, H, W*C)   second input, lane-dense
                  m1_ref,      # (3, W*C, W*C) banded fused conv weights (x1 half)
                  m2_ref,      # (3, W*C, W*C) banded fused conv weights (x2 half)
                  srow_ref,    # (3, H, H)     row-shift matrices for ky = 0,1,2
                  beff_ref,    # (1, W*C)      folded (depthwise+pointwise) bias, tiled
                  gsum_ref,    # (W*C, C)      lane-group sum matrix (for avg pool)
                  gtile_ref,   # (C, W*C)      lane-tile matrix (broadcast y2 over W)
                  w1_ref,      # (C, C//r)     CA squeeze weights (no bias)
                  w2_ref,      # (C//r, C)     CA excite weights (no bias)
                  o_ref,       # (1, H, W*C)
                  *, inv_hw):
    f32 = jnp.float32
    x1 = x1_ref[0]                                  # (H, W*C)
    x2 = x2_ref[0]

    # ---- fused depthwise-3x3 + pointwise-1x1 conv, entirely on the MXU ----
    # fea = sum_ky  S[ky] @ (x1 @ M1[ky] + x2 @ M2[ky])   (+ folded bias)
    fea = jnp.dot(x1, m1_ref[1], preferred_element_type=f32)
    fea = fea + jnp.dot(x2, m2_ref[1], preferred_element_type=f32)
    for ky in (0, 2):
        t = jnp.dot(x1, m1_ref[ky], preferred_element_type=f32)
        t = t + jnp.dot(x2, m2_ref[ky], preferred_element_type=f32)
        fea = fea + jnp.dot(srow_ref[ky], t, preferred_element_type=f32)
    fea = fea + beff_ref[...]                       # (1, W*C) broadcast

    # ---- channel attention (CALayer): global avg pool -> squeeze/excite ----
    colsum = jnp.sum(fea, axis=0, keepdims=True)                        # (1, W*C)
    y = jnp.dot(colsum, gsum_ref[...], preferred_element_type=f32) * inv_hw  # (1, C)
    y = jnp.maximum(jnp.dot(y, w1_ref[...], preferred_element_type=f32), 0.0)
    y = jax.nn.sigmoid(jnp.dot(y, w2_ref[...], preferred_element_type=f32))  # (1, C)
    scale = jnp.dot(y, gtile_ref[...], preferred_element_type=f32)           # (1, W*C)

    # ---- scale + residual add, lane-dense (unmasked) store ----
    o_ref[0] = (fea * scale + x1).astype(o_ref.dtype)


def s2fb2_forward(x1_nchw, x2_nchw, kparams):
    """x1, x2: (N, C, H, W) float32. Returns (N, C, H, W)."""
    M1, M2, srow, beff_t, gsum, gtile, w1k, w2k = kparams
    N, C, H, W = x1_nchw.shape
    WC = W * C

    # NCHW -> lane-dense (N, H, W*C).  No concat, no pad.
    x1 = jnp.transpose(x1_nchw, (0, 2, 3, 1)).reshape(N, H, WC)
    x2 = jnp.transpose(x2_nchw, (0, 2, 3, 1)).reshape(N, H, WC)

    kernel = functools.partial(_s2fb2_kernel, inv_hw=1.0 / (H * W))
    out = pl.pallas_call(
        kernel,
        out_shape=jax.ShapeDtypeStruct((N, H, WC), jnp.float32),
        grid_spec=pltpu.PrefetchScalarGridSpec(
            num_scalar_prefetch=0,
            grid=(N,),
            in_specs=[
                pl.BlockSpec((1, H, WC), lambda b: (b, 0, 0)),    # x1
                pl.BlockSpec((1, H, WC), lambda b: (b, 0, 0)),    # x2
                pl.BlockSpec((3, WC, WC), lambda b: (0, 0, 0)),   # M1
                pl.BlockSpec((3, WC, WC), lambda b: (0, 0, 0)),   # M2
                pl.BlockSpec((3, H, H), lambda b: (0, 0, 0)),     # srow
                pl.BlockSpec((1, WC), lambda b: (0, 0)),          # folded bias (tiled)
                pl.BlockSpec((WC, C), lambda b: (0, 0)),          # gsum
                pl.BlockSpec((C, WC), lambda b: (0, 0)),          # gtile
                pl.BlockSpec(w1k.shape, lambda b: (0, 0)),        # CA squeeze
                pl.BlockSpec(w2k.shape, lambda b: (0, 0)),        # CA excite
            ],
            out_specs=pl.BlockSpec((1, H, WC), lambda b: (b, 0, 0)),
        ),
        input_output_aliases={0: 0},      # reuse x1's buffer for the output
        # For larger spatial tiles (big H, W, C) also pass
        # vmem_limit_bytes=... here; at this size the default is ample.
        compiler_params=pltpu.CompilerParams(
            dimension_semantics=("parallel",)),
    )(x1, x2, M1, M2, srow, beff_t, gsum, gtile, w1k, w2k)

    return jnp.transpose(out.reshape(N, H, W, C), (0, 3, 1, 2))  # back to NCHW


def make_torch_params(key, n_feat, reduction):
    """Deterministic synthetic weights matching the PyTorch module shapes."""
    C, C2, mid = n_feat, 2 * n_feat, n_feat // reduction
    ks = jax.random.split(key, 6)
    scale = 0.1
    wdw_oihw = scale * jax.random.normal(ks[0], (C2, 1, 3, 3), jnp.float32)
    bdw = scale * jax.random.normal(ks[1], (C2,), jnp.float32)
    wpw_oihw = scale * jax.random.normal(ks[2], (C, C2, 1, 1), jnp.float32)
    bpw = scale * jax.random.normal(ks[3], (C,), jnp.float32)
    w1_oihw = scale * jax.random.normal(ks[4], (mid, C, 1, 1), jnp.float32)
    w2_oihw = scale * jax.random.normal(ks[5], (C, mid, 1, 1), jnp.float32)
    return (wdw_oihw, bdw, wpw_oihw, bpw, w1_oihw, w2_oihw)


def prepare_kernel_params(torch_params, H, W):
    """One-time weight folding: depthwise 3x3 * pointwise 1x1 -> per-ky banded
    (W*C, W*C) MXU matrices (zero padding folded into the band), folded bias,
    row-shift matrices, and lane-group sum/tile matrices for the CA layer."""
    wdw_oihw, bdw, wpw_oihw, bpw, w1_oihw, w2_oihw = torch_params
    C2 = wdw_oihw.shape[0]
    C = C2 // 2
    WC = W * C

    wdw = wdw_oihw[:, 0]                       # (2C, 3, 3)  [g, ky, kx]
    wpw = wpw_oihw[:, :, 0, 0]                 # (C, 2C)     [co, g]
    # K[ky, kx, g, co] = wdw[g, ky, kx] * wpw[co, g]
    K = jnp.einsum("gyx,og->yxgo", wdw, wpw)   # (3, 3, 2C, C)

    def banded(Kh):                            # (3, 3, C, C) -> (3, WC, WC)
        mats = []
        for ky in range(3):
            m = jnp.zeros((WC, WC), jnp.float32)
            for kx in range(3):
                m = m + jnp.kron(jnp.eye(W, k=1 - kx, dtype=jnp.float32),
                                 Kh[ky, kx])
            mats.append(m)
        return jnp.stack(mats)

    M1 = banded(K[:, :, :C, :])                # x1 half of the channels
    M2 = banded(K[:, :, C:, :])                # x2 half of the channels
    srow = jnp.stack([jnp.eye(H, k=k, dtype=jnp.float32) for k in (-1, 0, 1)])
    beff = bpw + wpw @ bdw                     # folded depthwise+pointwise bias
    beff_t = jnp.tile(beff, W).reshape(1, WC)
    gsum = jnp.kron(jnp.ones((W, 1), jnp.float32),
                    jnp.eye(C, dtype=jnp.float32))       # (WC, C)
    gtile = jnp.transpose(gsum)                          # (C, WC)
    w1k = jnp.transpose(w1_oihw[:, :, 0, 0])             # (C, mid)
    w2k = jnp.transpose(w2_oihw[:, :, 0, 0])             # (mid, C)
    return (M1, M2, srow, beff_t, gsum, gtile, w1k, w2k)


def ref_forward(x1, x2, torch_params):
    """Pure-JAX NCHW reference mirroring the PyTorch forward."""
    wdw_oihw, bdw, wpw_oihw, bpw, w1_oihw, w2_oihw = torch_params
    C2 = wdw_oihw.shape[0]
    xcat = jnp.concatenate([x1, x2], axis=1)
    dn = ("NCHW", "OIHW", "NCHW")
    dw = lax.conv_general_dilated(xcat, wdw_oihw, (1, 1), "SAME",
                                  feature_group_count=C2,
                                  dimension_numbers=dn)
    dw = dw + bdw[None, :, None, None]
    pw = lax.conv_general_dilated(dw, wpw_oihw, (1, 1), "SAME",
                                  dimension_numbers=dn)
    pw = pw + bpw[None, :, None, None]
    y = jnp.mean(pw, axis=(2, 3))                              # (N, C)
    y1 = jnp.maximum(y @ w1_oihw[:, :, 0, 0].T, 0.0)
    y2 = jax.nn.sigmoid(y1 @ w2_oihw[:, :, 0, 0].T)            # (N, C)
    return pw * y2[:, :, None, None] + x1


if __name__ == "__main__":
    N, n_feat, H, W = 2, 16, 16, 16
    reduction = 4

    key = jax.random.PRNGKey(0)
    k1, k2, kp = jax.random.split(key, 3)
    x1 = jax.random.normal(k1, (N, n_feat, H, W), jnp.float32)
    x2 = jax.random.normal(k2, (N, n_feat, H, W), jnp.float32)

    torch_params = make_torch_params(kp, n_feat, reduction)
    kparams = prepare_kernel_params(torch_params, H, W)

    fwd = jax.jit(s2fb2_forward)
    out = jax.block_until_ready(fwd(x1, x2, kparams))
    ref = jax.block_until_ready(ref_forward(x1, x2, torch_params))

    assert out.shape == (N, n_feat, H, W)
    max_err = float(jnp.max(jnp.abs(out - ref)))
    assert jnp.allclose(out, ref, atol=2e-4, rtol=2e-4), max_err

    print("KERNEL_OK")
</pallas_src>

<mosaic_0001>
module attributes {stable_mosaic.version = 11 : i64} {
  func.func @_s2fb2_kernel(%arg0: i32, %arg1: memref<1x16x256xf32, #tpu.memory_space<vmem>>, %arg2: memref<1x16x256xf32, #tpu.memory_space<vmem>>, %arg3: memref<3x256x256xf32, #tpu.memory_space<vmem>>, %arg4: memref<3x256x256xf32, #tpu.memory_space<vmem>>, %arg5: memref<3x16x16xf32, #tpu.memory_space<vmem>>, %arg6: memref<1x256xf32, #tpu.memory_space<vmem>>, %arg7: memref<256x16xf32, #tpu.memory_space<vmem>>, %arg8: memref<16x256xf32, #tpu.memory_space<vmem>>, %arg9: memref<16x4xf32, #tpu.memory_space<vmem>>, %arg10: memref<4x16xf32, #tpu.memory_space<vmem>>, %arg11: memref<1x16x256xf32, #tpu.memory_space<vmem>>) attributes {dimension_semantics = [#tpu.dimension_semantics<parallel>], iteration_bounds = array<i64: 2>, scalar_prefetch = 0 : i64, scratch_operands = 0 : i64, tpu.core_type = #tpu.core_type<tc>, window_params = [{transform_indices = @transform_0, window_bounds = array<i64: 1, 16, 256>}, {transform_indices = @transform_1, window_bounds = array<i64: 1, 16, 256>}, {pipeline_mode = #tpu.pipeline_mode<synchronous>, transform_indices = @transform_2, window_bounds = array<i64: 3, 256, 256>}, {pipeline_mode = #tpu.pipeline_mode<synchronous>, transform_indices = @transform_3, window_bounds = array<i64: 3, 256, 256>}, {pipeline_mode = #tpu.pipeline_mode<synchronous>, transform_indices = @transform_4, window_bounds = array<i64: 3, 16, 16>}, {pipeline_mode = #tpu.pipeline_mode<synchronous>, transform_indices = @transform_5, window_bounds = array<i64: 1, 256>}, {pipeline_mode = #tpu.pipeline_mode<synchronous>, transform_indices = @transform_6, window_bounds = array<i64: 256, 16>}, {pipeline_mode = #tpu.pipeline_mode<synchronous>, transform_indices = @transform_7, window_bounds = array<i64: 16, 256>}, {pipeline_mode = #tpu.pipeline_mode<synchronous>, transform_indices = @transform_8, window_bounds = array<i64: 16, 4>}, {pipeline_mode = #tpu.pipeline_mode<synchronous>, transform_indices = @transform_9, window_bounds = array<i64: 4, 16>}, {transform_indices = @transform_10, window_bounds = array<i64: 1, 16, 256>}]} {
    %c0 = arith.constant 0 : index
    %c0_0 = arith.constant 0 : index
    %c0_1 = arith.constant 0 : index
    %0 = vector.load %arg1[%c0, %c0_0, %c0_1] : memref<1x16x256xf32, #tpu.memory_space<vmem>>, vector<1x16x256xf32>
    %1 = vector.shape_cast %0 : vector<1x16x256xf32> to vector<16x256xf32>
    %c0_2 = arith.constant 0 : index
    %c0_3 = arith.constant 0 : index
    %c0_4 = arith.constant 0 : index
    %2 = vector.load %arg2[%c0_2, %c0_3, %c0_4] : memref<1x16x256xf32, #tpu.memory_space<vmem>>, vector<1x16x256xf32>
    %3 = vector.shape_cast %2 : vector<1x16x256xf32> to vector<16x256xf32>
    %c1 = arith.constant 1 : index
    %c0_5 = arith.constant 0 : index
    %c0_6 = arith.constant 0 : index
    %4 = vector.load %arg3[%c1, %c0_5, %c0_6] : memref<3x256x256xf32, #tpu.memory_space<vmem>>, vector<1x256x256xf32>
    %5 = vector.shape_cast %4 : vector<1x256x256xf32> to vector<256x256xf32>
    %cst = arith.constant dense<0.000000e+00> : vector<16x256xf32>
    %6 = tpu.matmul %1, %5, %cst {dimension_numbers = #tpu.dot_dimension_numbers<[1], [0], [0], [1], [0, 0, 1, 1], [], []>} : vector<16x256xf32>, vector<256x256xf32>, vector<16x256xf32> -> vector<16x256xf32>
    %c1_7 = arith.constant 1 : index
    %c0_8 = arith.constant 0 : index
    %c0_9 = arith.constant 0 : index
    %7 = vector.load %arg4[%c1_7, %c0_8, %c0_9] : memref<3x256x256xf32, #tpu.memory_space<vmem>>, vector<1x256x256xf32>
    %8 = vector.shape_cast %7 : vector<1x256x256xf32> to vector<256x256xf32>
    %cst_10 = arith.constant dense<0.000000e+00> : vector<16x256xf32>
    %9 = tpu.matmul %3, %8, %cst_10 {dimension_numbers = #tpu.dot_dimension_numbers<[1], [0], [0], [1], [0, 0, 1, 1], [], []>} : vector<16x256xf32>, vector<256x256xf32>, vector<16x256xf32> -> vector<16x256xf32>
    %10 = arith.addf %6, %9 : vector<16x256xf32>
    %c0_11 = arith.constant 0 : index
    %c0_12 = arith.constant 0 : index
    %c0_13 = arith.constant 0 : index
    %11 = vector.load %arg3[%c0_11, %c0_12, %c0_13] : memref<3x256x256xf32, #tpu.memory_space<vmem>>, vector<1x256x256xf32>
    %12 = vector.shape_cast %11 : vector<1x256x256xf32> to vector<256x256xf32>
    %cst_14 = arith.constant dense<0.000000e+00> : vector<16x256xf32>
    %13 = tpu.matmul %1, %12, %cst_14 {dimension_numbers = #tpu.dot_dimension_numbers<[1], [0], [0], [1], [0, 0, 1, 1], [], []>} : vector<16x256xf32>, vector<256x256xf32>, vector<16x256xf32> -> vector<16x256xf32>
    %c0_15 = arith.constant 0 : index
    %c0_16 = arith.constant 0 : index
    %c0_17 = arith.constant 0 : index
    %14 = vector.load %arg4[%c0_15, %c0_16, %c0_17] : memref<3x256x256xf32, #tpu.memory_space<vmem>>, vector<1x256x256xf32>
    %15 = vector.shape_cast %14 : vector<1x256x256xf32> to vector<256x256xf32>
    %cst_18 = arith.constant dense<0.000000e+00> : vector<16x256xf32>
    %16 = tpu.matmul %3, %15, %cst_18 {dimension_numbers = #tpu.dot_dimension_numbers<[1], [0], [0], [1], [0, 0, 1, 1], [], []>} : vector<16x256xf32>, vector<256x256xf32>, vector<16x256xf32> -> vector<16x256xf32>
    %17 = arith.addf %13, %16 : vector<16x256xf32>
    %c0_19 = arith.constant 0 : index
    %c0_20 = arith.constant 0 : index
    %c0_21 = arith.constant 0 : index
    %18 = vector.load %arg5[%c0_19, %c0_20, %c0_21] : memref<3x16x16xf32, #tpu.memory_space<vmem>>, vector<1x16x16xf32>
    %19 = vector.shape_cast %18 : vector<1x16x16xf32> to vector<16x16xf32>
    %cst_22 = arith.constant dense<0.000000e+00> : vector<16x256xf32>
    %20 = tpu.matmul %19, %17, %cst_22 {dimension_numbers = #tpu.dot_dimension_numbers<[1], [0], [0], [1], [0, 0, 1, 1], [], []>} : vector<16x16xf32>, vector<16x256xf32>, vector<16x256xf32> -> vector<16x256xf32>
    %21 = arith.addf %10, %20 : vector<16x256xf32>
    %c2 = arith.constant 2 : index
    %c0_23 = arith.constant 0 : index
    %c0_24 = arith.constant 0 : index
    %22 = vector.load %arg3[%c2, %c0_23, %c0_24] : memref<3x256x256xf32, #tpu.memory_space<vmem>>, vector<1x256x256xf32>
    %23 = vector.shape_cast %22 : vector<1x256x256xf32> to vector<256x256xf32>
    %cst_25 = arith.constant dense<0.000000e+00> : vector<16x256xf32>
    %24 = tpu.matmul %1, %23, %cst_25 {dimension_numbers = #tpu.dot_dimension_numbers<[1], [0], [0], [1], [0, 0, 1, 1], [], []>} : vector<16x256xf32>, vector<256x256xf32>, vector<16x256xf32> -> vector<16x256xf32>
    %c2_26 = arith.constant 2 : index
    %c0_27 = arith.constant 0 : index
    %c0_28 = arith.constant 0 : index
    %25 = vector.load %arg4[%c2_26, %c0_27, %c0_28] : memref<3x256x256xf32, #tpu.memory_space<vmem>>, vector<1x256x256xf32>
    %26 = vector.shape_cast %25 : vector<1x256x256xf32> to vector<256x256xf32>
    %cst_29 = arith.constant dense<0.000000e+00> : vector<16x256xf32>
    %27 = tpu.matmul %3, %26, %cst_29 {dimension_numbers = #tpu.dot_dimension_numbers<[1], [0], [0], [1], [0, 0, 1, 1], [], []>} : vector<16x256xf32>, vector<256x256xf32>, vector<16x256xf32> -> vector<16x256xf32>
    %28 = arith.addf %24, %27 : vector<16x256xf32>
    %c2_30 = arith.constant 2 : index
    %c0_31 = arith.constant 0 : index
    %c0_32 = arith.constant 0 : index
    %29 = vector.load %arg5[%c2_30, %c0_31, %c0_32] : memref<3x16x16xf32, #tpu.memory_space<vmem>>, vector<1x16x16xf32>
    %30 = vector.shape_cast %29 : vector<1x16x16xf32> to vector<16x16xf32>
    %cst_33 = arith.constant dense<0.000000e+00> : vector<16x256xf32>
    %31 = tpu.matmul %30, %28, %cst_33 {dimension_numbers = #tpu.dot_dimension_numbers<[1], [0], [0], [1], [0, 0, 1, 1], [], []>} : vector<16x16xf32>, vector<16x256xf32>, vector<16x256xf32> -> vector<16x256xf32>
    %32 = arith.addf %21, %31 : vector<16x256xf32>
    %c0_34 = arith.constant 0 : index
    %c0_35 = arith.constant 0 : index
    %33 = vector.load %arg6[%c0_34, %c0_35] : memref<1x256xf32, #tpu.memory_space<vmem>>, vector<1x256xf32>
    %34 = vector.broadcast %33 : vector<1x256xf32> to vector<16x256xf32>
    %35 = arith.addf %32, %34 : vector<16x256xf32>
    %cst_36 = arith.constant dense<0.000000e+00> : vector<256xf32>
    %36 = vector.multi_reduction <add>, %35, %cst_36 [0] : vector<16x256xf32> to vector<256xf32>
    %37 = vector.shape_cast %36 : vector<256xf32> to vector<1x256xf32>
    %c0_37 = arith.constant 0 : index
    %c0_38 = arith.constant 0 : index
    %38 = vector.load %arg7[%c0_37, %c0_38] : memref<256x16xf32, #tpu.memory_space<vmem>>, vector<256x16xf32>
    %cst_39 = arith.constant dense<0.000000e+00> : vector<1x16xf32>
    %39 = tpu.matmul %37, %38, %cst_39 {dimension_numbers = #tpu.dot_dimension_numbers<[1], [0], [0], [1], [0, 0, 1, 1], [], []>} : vector<1x256xf32>, vector<256x16xf32>, vector<1x16xf32> -> vector<1x16xf32>
    %cst_40 = arith.constant 3.906250e-03 : f32
    %40 = vector.broadcast %cst_40 : f32 to vector<1x16xf32>
    %41 = arith.mulf %39, %40 : vector<1x16xf32>
    %c0_41 = arith.constant 0 : index
    %c0_42 = arith.constant 0 : index
    %42 = vector.load %arg9[%c0_41, %c0_42] : memref<16x4xf32, #tpu.memory_space<vmem>>, vector<16x4xf32>
    %cst_43 = arith.constant dense<0.000000e+00> : vector<1x4xf32>
    %43 = tpu.matmul %41, %42, %cst_43 {dimension_numbers = #tpu.dot_dimension_numbers<[1], [0], [0], [1], [0, 0, 1, 1], [], []>} : vector<1x16xf32>, vector<16x4xf32>, vector<1x4xf32> -> vector<1x4xf32>
    %cst_44 = arith.constant 0.000000e+00 : f32
    %44 = vector.broadcast %cst_44 : f32 to vector<1x4xf32>
    %45 = arith.maximumf %43, %44 : vector<1x4xf32>
    %c0_45 = arith.constant 0 : index
    %c0_46 = arith.constant 0 : index
    %46 = vector.load %arg10[%c0_45, %c0_46] : memref<4x16xf32, #tpu.memory_space<vmem>>, vector<4x16xf32>
    %cst_47 = arith.constant dense<0.000000e+00> : vector<1x16xf32>
    %47 = tpu.matmul %45, %46, %cst_47 {dimension_numbers = #tpu.dot_dimension_numbers<[1], [0], [0], [1], [0, 0, 1, 1], [], []>} : vector<1x4xf32>, vector<4x16xf32>, vector<1x16xf32> -> vector<1x16xf32>
    %48 = arith.negf %47 : vector<1x16xf32>
    %49 = math.exp %48 : vector<1x16xf32>
    %cst_48 = arith.constant 1.000000e+00 : f32
    %50 = vector.broadcast %cst_48 : f32 to vector<1x16xf32>
    %51 = arith.addf %50, %49 : vector<1x16xf32>
    %52 = arith.divf %50, %51 : vector<1x16xf32>
    %c0_49 = arith.constant 0 : index
    %c0_50 = arith.constant 0 : index
    %53 = vector.load %arg8[%c0_49, %c0_50] : memref<16x256xf32, #tpu.memory_space<vmem>>, vector<16x256xf32>
    %cst_51 = arith.constant dense<0.000000e+00> : vector<1x256xf32>
    %54 = tpu.matmul %52, %53, %cst_51 {dimension_numbers = #tpu.dot_dimension_numbers<[1], [0], [0], [1], [0, 0, 1, 1], [], []>} : vector<1x16xf32>, vector<16x256xf32>, vector<1x256xf32> -> vector<1x256xf32>
    %55 = vector.broadcast %54 : vector<1x256xf32> to vector<16x256xf32>
    %56 = arith.mulf %35, %55 : vector<16x256xf32>
    %57 = arith.addf %56, %1 : vector<16x256xf32>
    %c0_52 = arith.constant 0 : index
    %c0_53 = arith.constant 0 : index
    %c0_54 = arith.constant 0 : index
    %58 = vector.load %arg11[%c0_52, %c0_53, %c0_54] : memref<1x16x256xf32, #tpu.memory_space<vmem>>, vector<1x16x256xf32>
    %59 = vector.shape_cast %58 : vector<1x16x256xf32> to vector<16x256xf32>
    %60 = vector.shape_cast %57 : vector<16x256xf32> to vector<1x16x256xf32>
    tpu.vector_store %arg11[%c0_52, %c0_53, %c0_54], %60 {strides = array<i32>} : memref<1x16x256xf32, #tpu.memory_space<vmem>>, vector<1x16x256xf32>,
    return
  }
  func.func @transform_0(%arg0: i32) -> (i32, i32, i32) {
    %c0_i32 = arith.constant 0 : i32
    %c0_i32_0 = arith.constant 0 : i32
    %c0_i32_1 = arith.constant 0 : i32
    return %arg0, %c0_i32, %c0_i32_0 : i32, i32, i32
  }
  func.func @transform_1(%arg0: i32) -> (i32, i32, i32) {
    %c0_i32 = arith.constant 0 : i32
    %c0_i32_0 = arith.constant 0 : i32
    %c0_i32_1 = arith.constant 0 : i32
    return %arg0, %c0_i32, %c0_i32_0 : i32, i32, i32
  }
  func.func @transform_2(%arg0: i32) -> (i32, i32, i32) {
    %c0_i32 = arith.constant 0 : i32
    %c0_i32_0 = arith.constant 0 : i32
    %c0_i32_1 = arith.constant 0 : i32
    %c0_i32_2 = arith.constant 0 : i32
    return %c0_i32, %c0_i32_0, %c0_i32_1 : i32, i32, i32
  }
  func.func @transform_3(%arg0: i32) -> (i32, i32, i32) {
    %c0_i32 = arith.constant 0 : i32
    %c0_i32_0 = arith.constant 0 : i32
    %c0_i32_1 = arith.constant 0 : i32
    %c0_i32_2 = arith.constant 0 : i32
    return %c0_i32, %c0_i32_0, %c0_i32_1 : i32, i32, i32
  }
  func.func @transform_4(%arg0: i32) -> (i32, i32, i32) {
    %c0_i32 = arith.constant 0 : i32
    %c0_i32_0 = arith.constant 0 : i32
    %c0_i32_1 = arith.constant 0 : i32
    %c0_i32_2 = arith.constant 0 : i32
    return %c0_i32, %c0_i32_0, %c0_i32_1 : i32, i32, i32
  }
  func.func @transform_5(%arg0: i32) -> (i32, i32) {
    %c0_i32 = arith.constant 0 : i32
    %c0_i32_0 = arith.constant 0 : i32
    %c0_i32_1 = arith.constant 0 : i32
    return %c0_i32, %c0_i32_0 : i32, i32
  }
  func.func @transform_6(%arg0: i32) -> (i32, i32) {
    %c0_i32 = arith.constant 0 : i32
    %c0_i32_0 = arith.constant 0 : i32
    %c0_i32_1 = arith.constant 0 : i32
    return %c0_i32, %c0_i32_0 : i32, i32
  }
  func.func @transform_7(%arg0: i32) -> (i32, i32) {
    %c0_i32 = arith.constant 0 : i32
    %c0_i32_0 = arith.constant 0 : i32
    %c0_i32_1 = arith.constant 0 : i32
    return %c0_i32, %c0_i32_0 : i32, i32
  }
  func.func @transform_8(%arg0: i32) -> (i32, i32) {
    %c0_i32 = arith.constant 0 : i32
    %c0_i32_0 = arith.constant 0 : i32
    %c0_i32_1 = arith.constant 0 : i32
    return %c0_i32, %c0_i32_0 : i32, i32
  }
  func.func @transform_9(%arg0: i32) -> (i32, i32) {
    %c0_i32 = arith.constant 0 : i32
    %c0_i32_0 = arith.constant 0 : i32
    %c0_i32_1 = arith.constant 0 : i32
    return %c0_i32, %c0_i32_0 : i32, i32
  }
  func.func @transform_10(%arg0: i32) -> (i32, i32, i32) {
    %c0_i32 = arith.constant 0 : i32
    %c0_i32_0 = arith.constant 0 : i32
    %c0_i32_1 = arith.constant 0 : i32
    return %arg0, %c0_i32, %c0_i32_0 : i32, i32, i32
  }
}

</mosaic_0001>

<llo_original>
// kernel: s2fb2_forward.1
$region0: #{s2fb2_forward.1}
  #allocation0 [shape = 'u32[]', space=smem, size = 0x4, offset = 0x4, fixed_abs, tag = 'smem constant byte address 0x4 - core index']
  #allocation1 [shape = 'u32[144,128]{1,0:T(1,128)}', space=vmem, size = 0x12000, scoped, tag = 'internal scratch']
  %s0 = inlined_call_operand.vmem [shape: f32[2,16,256], index: 0, kind: input, shape index: {}, may-alias: {0,10}]
  %s1 = inlined_call_operand.vmem [shape: f32[2,16,256], index: 1, kind: input, shape index: {}]
  %s2 = inlined_call_operand.vmem [shape: f32[3,256,256], index: 2, kind: input, shape index: {}]
  %s3 = inlined_call_operand.vmem [shape: f32[3,256,256], index: 3, kind: input, shape index: {}]
  %s4 = inlined_call_operand.vmem [shape: f32[3,16,16], index: 4, kind: input, shape index: {}]
  %s5 = inlined_call_operand.vmem [shape: f32[1,256], index: 5, kind: input, shape index: {}]
  %s6 = inlined_call_operand.vmem [shape: f32[256,16], index: 6, kind: input, shape index: {}]
  %s7 = inlined_call_operand.vmem [shape: f32[16,256], index: 7, kind: input, shape index: {}]
  %s8 = inlined_call_operand.vmem [shape: f32[16,4], index: 8, kind: input, shape index: {}]
  %s9 = inlined_call_operand.vmem [shape: f32[4,16], index: 9, kind: input, shape index: {}]
  %s10 = inlined_call_operand.vmem [shape: f32[2,16,256], index: 10, kind: output, shape index: {}, may-alias: {0,10}]
  %s11 = sld [smem:[#allocation0]]
  $region73: #{s2fb2_forward.1} parent=0
    _
  %s13 = ssub.s32 1, %s11
  %s14 = scalar_select 0, %s13, %s11
  loop: start=0, step=1, limit=4
  $region2: #{s2fb2_forward.1} parent=0 // loop_pre_header
    _
  $region3: #{s2fb2_forward.1} parent=0 // loop_header
    %s16 = sphi 0, %s20
    %p17 = scmp.ge.s32.totalorder %s16, 4
    %s26 = sphi 0, %s28
    %s29 = sphi 0, %s26
    %s30 = sphi 0, %s29
    %s46 = sphi 0, %s30
    %s52 = sphi 0, %s54
    %s55 = sphi 0, %s52
    %s56 = sphi 0, %s55
    %s72 = sphi 0, %s56
    %s76 = sphi 0, %s76
    %s78 = sphi 0, %s76
    %s79 = sphi 0, %s78
    %s93 = sphi 0, %s79
    %s97 = sphi 0, %s97
    %s99 = sphi 0, %s97
    %s100 = sphi 0, %s99
    %s114 = sphi 0, %s100
    %s118 = sphi 0, %s118
    %s120 = sphi 0, %s118
    %s121 = sphi 0, %s120
    %s135 = sphi 0, %s121
    %s139 = sphi 0, %s139
    %s141 = sphi 0, %s139
    %s142 = sphi 0, %s141
    %s156 = sphi 0, %s142
    %s160 = sphi 0, %s160
    %s162 = sphi 0, %s160
    %s163 = sphi 0, %s162
    %s177 = sphi 0, %s163
    %s181 = sphi 0, %s181
    %s183 = sphi 0, %s181
    %s184 = sphi 0, %s183
    %s198 = sphi 0, %s184
    %s202 = sphi 0, %s202
    %s204 = sphi 0, %s202
    %s205 = sphi 0, %s204
    %s219 = sphi 0, %s205
    %s223 = sphi 0, %s223
    %s225 = sphi 0, %s223
    %s226 = sphi 0, %s225
    %s240 = sphi 0, %s226
    %s246 = sphi 0, %s248
    %s249 = sphi 0, %s246
    %s250 = sphi 0, %s249
    %s266 = sphi 0, %s250
  $region4: #{s2fb2_forward.1} parent=0 // loop_header_branch
    %19 = sbr.rel (%p17) target = $region8
  $region5: #{s2fb2_forward.1} parent=0 // loop_body
    %s21 = ssub.s32 %s16, 1
    %s22 = ssub.s32 %s16, 2
    %s23 = sadd.s32 %s16, 1
    %s24 = ssub.s32 %s16, %s23
    %p25 = scmp.eq.s32.totalorder %s24, 0
    %s27 = sadd.s32 %s26, 1
    %s28 = scalar_select %p25, %s26, %s27
    %p31 = pneg %p25
    %p32 = scmp.eq.s32.totalorder %s16, 1
    %p33 = por %p31, %p32
    %p34 = scmp.ne.s32.totalorder %s26, %s29
    %p35 = scmp.eq.s32.totalorder %s16, 0
    %p36 = por %p34, %p35
    %p37 = scmp.ne.s32.totalorder %s26, %s29
    %p38 = scmp.eq.s32.totalorder %s21, 1
    %p39 = por %p37, %p38
    %p40 = scmp.ne.s32.totalorder %s29, %s30
    %p41 = scmp.eq.s32.totalorder %s21, 0
    %p42 = por %p40, %p41
    %p43 = scmp.ne.s32.totalorder %s29, %s30
    %p44 = scmp.eq.s32.totalorder %s22, 1
    %p45 = por %p43, %p44
    %p47 = scmp.ne.s32.totalorder %s30, %s46
    %p48 = scmp.eq.s32.totalorder %s22, 0
    %p49 = por %p47, %p48
    %s50 = ssub.s32 %s16, %s23
    %p51 = scmp.eq.s32.totalorder %s50, 0
    %s53 = sadd.s32 %s52, 1
    %s54 = scalar_select %p51, %s52, %s53
    %p57 = pneg %p51
    %p58 = scmp.eq.s32.totalorder %s16, 1
    %p59 = por %p57, %p58
    %p60 = scmp.ne.s32.totalorder %s52, %s55
    %p61 = scmp.eq.s32.totalorder %s16, 0
    %p62 = por %p60, %p61
    %p63 = scmp.ne.s32.totalorder %s52, %s55
    %p64 = scmp.eq.s32.totalorder %s21, 1
    %p65 = por %p63, %p64
    %p66 = scmp.ne.s32.totalorder %s55, %s56
    %p67 = scmp.eq.s32.totalorder %s21, 0
    %p68 = por %p66, %p67
    %p69 = scmp.ne.s32.totalorder %s55, %s56
    %p70 = scmp.eq.s32.totalorder %s22, 1
    %p71 = por %p69, %p70
    %p73 = scmp.ne.s32.totalorder %s56, %s72
    %p74 = scmp.eq.s32.totalorder %s22, 0
    %p75 = por %p73, %p74
    %s77 = sadd.s32 %s76, 1
    %p80 = scmp.eq.s32.totalorder %s16, 1
    %p81 = scmp.ne.s32.totalorder %s76, %s78
    %p82 = scmp.eq.s32.totalorder %s16, 0
    %p83 = por %p81, %p82
    %p84 = scmp.ne.s32.totalorder %s76, %s78
    %p85 = scmp.eq.s32.totalorder %s21, 1
    %p86 = por %p84, %p85
    %p87 = scmp.ne.s32.totalorder %s78, %s79
    %p88 = scmp.eq.s32.totalorder %s21, 0
    %p89 = por %p87, %p88
    %p90 = scmp.ne.s32.totalorder %s78, %s79
    %p91 = scmp.eq.s32.totalorder %s22, 1
    %p92 = por %p90, %p91
    %p94 = scmp.ne.s32.totalorder %s79, %s93
    %p95 = scmp.eq.s32.totalorder %s22, 0
    %p96 = por %p94, %p95
    %s98 = sadd.s32 %s97, 1
    %p101 = scmp.eq.s32.totalorder %s16, 1
    %p102 = scmp.ne.s32.totalorder %s97, %s99
    %p103 = scmp.eq.s32.totalorder %s16, 0
    %p104 = por %p102, %p103
    %p105 = scmp.ne.s32.totalorder %s97, %s99
    %p106 = scmp.eq.s32.totalorder %s21, 1
    %p107 = por %p105, %p106
    %p108 = scmp.ne.s32.totalorder %s99, %s100
    %p109 = scmp.eq.s32.totalorder %s21, 0
    %p110 = por %p108, %p109
    %p111 = scmp.ne.s32.totalorder %s99, %s100
    %p112 = scmp.eq.s32.totalorder %s22, 1
    %p113 = por %p111, %p112
    %p115 = scmp.ne.s32.totalorder %s100, %s114
    %p116 = scmp.eq.s32.totalorder %s22, 0
    %p117 = por %p115, %p116
    %s119 = sadd.s32 %s118, 1
    %p122 = scmp.eq.s32.totalorder %s16, 1
    %p123 = scmp.ne.s32.totalorder %s118, %s120
    %p124 = scmp.eq.s32.totalorder %s16, 0
    %p125 = por %p123, %p124
    %p126 = scmp.ne.s32.totalorder %s118, %s120
    %p127 = scmp.eq.s32.totalorder %s21, 1
    %p128 = por %p126, %p127
    %p129 = scmp.ne.s32.totalorder %s120, %s121
    %p130 = scmp.eq.s32.totalorder %s21, 0
    %p131 = por %p129, %p130
    %p132 = scmp.ne.s32.totalorder %s120, %s121
    %p133 = scmp.eq.s32.totalorder %s22, 1
    %p134 = por %p132, %p133
    %p136 = scmp.ne.s32.totalorder %s121, %s135
    %p137 = scmp.eq.s32.totalorder %s22, 0
    %p138 = por %p136, %p137
    %s140 = sadd.s32 %s139, 1
    %p143 = scmp.eq.s32.totalorder %s16, 1
    %p144 = scmp.ne.s32.totalorder %s139, %s141
    %p145 = scmp.eq.s32.totalorder %s16, 0
    %p146 = por %p144, %p145
    %p147 = scmp.ne.s32.totalorder %s139, %s141
    %p148 = scmp.eq.s32.totalorder %s21, 1
    %p149 = por %p147, %p148
    %p150 = scmp.ne.s32.totalorder %s141, %s142
    %p151 = scmp.eq.s32.totalorder %s21, 0
    %p152 = por %p150, %p151
    %p153 = scmp.ne.s32.totalorder %s141, %s142
    %p154 = scmp.eq.s32.totalorder %s22, 1
    %p155 = por %p153, %p154
    %p157 = scmp.ne.s32.totalorder %s142, %s156
    %p158 = scmp.eq.s32.totalorder %s22, 0
    %p159 = por %p157, %p158
    %s161 = sadd.s32 %s160, 1
    %p164 = scmp.eq.s32.totalorder %s16, 1
    %p165 = scmp.ne.s32.totalorder %s160, %s162
    %p166 = scmp.eq.s32.totalorder %s16, 0
    %p167 = por %p165, %p166
    %p168 = scmp.ne.s32.totalorder %s160, %s162
    %p169 = scmp.eq.s32.totalorder %s21, 1
    %p170 = por %p168, %p169
    %p171 = scmp.ne.s32.totalorder %s162, %s163
    %p172 = scmp.eq.s32.totalorder %s21, 0
    %p173 = por %p171, %p172
    %p174 = scmp.ne.s32.totalorder %s162, %s163
    %p175 = scmp.eq.s32.totalorder %s22, 1
    %p176 = por %p174, %p175
    %p178 = scmp.ne.s32.totalorder %s163, %s177
    %p179 = scmp.eq.s32.totalorder %s22, 0
    %p180 = por %p178, %p179
    %s182 = sadd.s32 %s181, 1
    %p185 = scmp.eq.s32.totalorder %s16, 1
    %p186 = scmp.ne.s32.totalorder %s181, %s183
    %p187 = scmp.eq.s32.totalorder %s16, 0
    %p188 = por %p186, %p187
    %p189 = scmp.ne.s32.totalorder %s181, %s183
    %p190 = scmp.eq.s32.totalorder %s21, 1
    %p191 = por %p189, %p190
    %p192 = scmp.ne.s32.totalorder %s183, %s184
    %p193 = scmp.eq.s32.totalorder %s21, 0
    %p194 = por %p192, %p193
    %p195 = scmp.ne.s32.totalorder %s183, %s184
    %p196 = scmp.eq.s32.totalorder %s22, 1
    %p197 = por %p195, %p196
    %p199 = scmp.ne.s32.totalorder %s184, %s198
    %p200 = scmp.eq.s32.totalorder %s22, 0
    %p201 = por %p199, %p200
    %s203 = sadd.s32 %s202, 1
    %p206 = scmp.eq.s32.totalorder %s16, 1
    %p207 = scmp.ne.s32.totalorder %s202, %s204
    %p208 = scmp.eq.s32.totalorder %s16, 0
    %p209 = por %p207, %p208
    %p210 = scmp.ne.s32.totalorder %s202, %s204
    %p211 = scmp.eq.s32.totalorder %s21, 1
    %p212 = por %p210, %p211
    %p213 = scmp.ne.s32.totalorder %s204, %s205
    %p214 = scmp.eq.s32.totalorder %s21, 0
    %p215 = por %p213, %p214
    %p216 = scmp.ne.s32.totalorder %s204, %s205
    %p217 = scmp.eq.s32.totalorder %s22, 1
    %p218 = por %p216, %p217
    %p220 = scmp.ne.s32.totalorder %s205, %s219
    %p221 = scmp.eq.s32.totalorder %s22, 0
    %p222 = por %p220, %p221
    %s224 = sadd.s32 %s223, 1
    %p227 = scmp.eq.s32.totalorder %s16, 1
    %p228 = scmp.ne.s32.totalorder %s223, %s225
    %p229 = scmp.eq.s32.totalorder %s16, 0
    %p230 = por %p228, %p229
    %p231 = scmp.ne.s32.totalorder %s223, %s225
    %p232 = scmp.eq.s32.totalorder %s21, 1
    %p233 = por %p231, %p232
    %p234 = scmp.ne.s32.totalorder %s225, %s226
    %p235 = scmp.eq.s32.totalorder %s21, 0
    %p236 = por %p234, %p235
    %p237 = scmp.ne.s32.totalorder %s225, %s226
    %p238 = scmp.eq.s32.totalorder %s22, 1
    %p239 = por %p237, %p238
    %p241 = scmp.ne.s32.totalorder %s226, %s240
    %p242 = scmp.eq.s32.totalorder %s22, 0
    %p243 = por %p241, %p242
    %s244 = ssub.s32 %s16, %s23
    %p245 = scmp.eq.s32.totalorder %s244, 0
    %s247 = sadd.s32 %s246, 1
    %s248 = scalar_select %p245, %s246, %s247
    %p251 = pneg %p245
    %p252 = scmp.eq.s32.totalorder %s16, 1
    %p253 = por %p251, %p252
    %p254 = scmp.ne.s32.totalorder %s246, %s249
    %p255 = scmp.eq.s32.totalorder %s16, 0
    %p256 = por %p254, %p255
    %p257 = scmp.ne.s32.totalorder %s246, %s249
    %p258 = scmp.eq.s32.totalorder %s21, 1
    %p259 = por %p257, %p258
    %p260 = scmp.ne.s32.totalorder %s249, %s250
    %p261 = scmp.eq.s32.totalorder %s21, 0
    %p262 = por %p260, %p261
    %p263 = scmp.ne.s32.totalorder %s249, %s250
    %p264 = scmp.eq.s32.totalorder %s22, 1
    %p265 = por %p263, %p264
    %p267 = scmp.ne.s32.totalorder %s250, %s266
    %p268 = scmp.eq.s32.totalorder %s22, 0
    %p269 = por %p267, %p268
    %p270 = scmp.le.s32.totalorder 1, %s16
    %p271 = scmp.lt.s32.totalorder %s16, 3
    %p272 = pnand %p270, %p271
    %p273 = pneg %p272
    // Predicated region
    $region9: #{s2fb2_forward.1} parent=5 // pred_check
      _
    $region10: #{s2fb2_forward.1} parent=5 // pred_check_branch
      %275 = sbr.rel (%p272) target = $region12
    $region11: #{s2fb2_forward.1} parent=5 // pred_region
      %s276 = ssub.s32 %s16, 1
      // Predicated region
      $region13: #{s2fb2_forward.1} parent=11 // pred_check
        %p277 = pneg %p89
      $region14: #{s2fb2_forward.1} parent=11 // pred_check_branch
        %279 = sbr.rel (%p277) target = $region16
      $region15: #{s2fb2_forward.1} parent=11 // pred_region
        _
      $region16: #{s2fb2_forward.1} parent=11 // pred_fallthru
        _
      // Predicated region
      $region17: #{s2fb2_forward.1} parent=11 // pred_check
        %p280 = pneg %p110
      $region18: #{s2fb2_forward.1} parent=11 // pred_check_branch
        %282 = sbr.rel (%p280) target = $region20
      $region19: #{s2fb2_forward.1} parent=11 // pred_region
        _
      $region20: #{s2fb2_forward.1} parent=11 // pred_fallthru
        _
      // Predicated region
      $region21: #{s2fb2_forward.1} parent=11 // pred_check
        %p283 = pneg %p131
      $region22: #{s2fb2_forward.1} parent=11 // pred_check_branch
        %285 = sbr.rel (%p283) target = $region24
      $region23: #{s2fb2_forward.1} parent=11 // pred_region
        _
      $region24: #{s2fb2_forward.1} parent=11 // pred_fallthru
        _
      // Predicated region
      $region25: #{s2fb2_forward.1} parent=11 // pred_check
        %p286 = pneg %p152
      $region26: #{s2fb2_forward.1} parent=11 // pred_check_branch
        %288 = sbr.rel (%p286) target = $region28
      $region27: #{s2fb2_forward.1} parent=11 // pred_region
        _
      $region28: #{s2fb2_forward.1} parent=11 // pred_fallthru
        _
      // Predicated region
      $region29: #{s2fb2_forward.1} parent=11 // pred_check
        %p289 = pneg %p173
      $region30: #{s2fb2_forward.1} parent=11 // pred_check_branch
        %291 = sbr.rel (%p289) target = $region32
      $region31: #{s2fb2_forward.1} parent=11 // pred_region
        _
      $region32: #{s2fb2_forward.1} parent=11 // pred_fallthru
        _
      // Predicated region
      $region33: #{s2fb2_forward.1} parent=11 // pred_check
        %p292 = pneg %p194
      $region34: #{s2fb2_forward.1} parent=11 // pred_check_branch
        %294 = sbr.rel (%p292) target = $region36
      $region35: #{s2fb2_forward.1} parent=11 // pred_region
        _
      $region36: #{s2fb2_forward.1} parent=11 // pred_fallthru
        _
      // Predicated region
      $region37: #{s2fb2_forward.1} parent=11 // pred_check
        %p295 = pneg %p215
      $region38: #{s2fb2_forward.1} parent=11 // pred_check_branch
        %297 = sbr.rel (%p295) target = $region40
      $region39: #{s2fb2_forward.1} parent=11 // pred_region
        _
      $region40: #{s2fb2_forward.1} parent=11 // pred_fallthru
        _
      // Predicated region
      $region41: #{s2fb2_forward.1} parent=11 // pred_check
        %p298 = pneg %p236
      $region42: #{s2fb2_forward.1} parent=11 // pred_check_branch
        %300 = sbr.rel (%p298) target = $region44
      $region43: #{s2fb2_forward.1} parent=11 // pred_region
        _
      $region44: #{s2fb2_forward.1} parent=11 // pred_fallthru
        _
    $region12: #{s2fb2_forward.1} parent=5 // pred_fallthru
      _
    %p301 = scmp.lt.s32.totalorder %s16, 2
    // Predicated region
    $region45: #{s2fb2_forward.1} parent=5 // pred_check
      %p302 = pneg %p301
    $region46: #{s2fb2_forward.1} parent=5 // pred_check_branch
      %304 = sbr.rel (%p302) target = $region48
    $region47: #{s2fb2_forward.1} parent=5 // pred_region
      // Predicated region
      $region49: #{s2fb2_forward.1} parent=47 // pred_check
        %p305 = pneg %p36
      $region50: #{s2fb2_forward.1} parent=47 // pred_check_branch
        %307 = sbr.rel (%p305) target = $region52
      $region51: #{s2fb2_forward.1} parent=47 // pred_region
        %p308 = scmp.lt.s32.totalorder %s16, 1
        %s309 = scalar_select %p308, %s16, 1
        %s310 = smul.addr %s309, 4
        %s311 = smul.addr %s310, 8
        %s312 = scalar_lea.vmem %s0, %s311
      $region52: #{s2fb2_forward.1} parent=47 // pred_fallthru
        _
      // Predicated region
      $region53: #{s2fb2_forward.1} parent=47 // pred_check
        %p313 = pneg %p62
      $region54: #{s2fb2_forward.1} parent=47 // pred_check_branch
        %315 = sbr.rel (%p313) target = $region56
      $region55: #{s2fb2_forward.1} parent=47 // pred_region
        %p316 = scmp.lt.s32.totalorder %s16, 1
        %s317 = scalar_select %p316, %s16, 1
        %s318 = smul.addr %s317, 4
        %s319 = smul.addr %s318, 8
        %s320 = scalar_lea.vmem %s1, %s319
      $region56: #{s2fb2_forward.1} parent=47 // pred_fallthru
        _
    $region48: #{s2fb2_forward.1} parent=5 // pred_fallthru
      _
    %p321 = scmp.le.s32.totalorder 1, %s16
    %p322 = scmp.lt.s32.totalorder %s16, 3
    %p323 = pnand %p321, %p322
    %p324 = pneg %p323
    // Predicated region
    $region57: #{s2fb2_forward.1} parent=5 // pred_check
      _
    $region58: #{s2fb2_forward.1} parent=5 // pred_check_branch
      %326 = sbr.rel (%p323) target = $region60
    $region59: #{s2fb2_forward.1} parent=5 // pred_region
      %s327 = ssub.s32 %s16, 1
      %p328 = scmp.lt.s32.totalorder %s21, 1
      %s329 = scalar_select %p328, %s21, 1
      %s330 = smul.addr %s329, 4
      %s331 = smul.addr %s330, 8
      %s332 = scalar_lea.vmem %s0, %s331
      %p333 = pneg %p42
      %p334 = pneg %p39
      %p335 = scmp.lt.s32.totalorder %s21, 1
      %s336 = scalar_select %p335, %s21, 1
      %s337 = smul.addr %s336, 4
      %s338 = smul.addr %s337, 8
      %s339 = scalar_lea.vmem %s1, %s338
      %p340 = pneg %p68
      %p341 = pneg %p65
      %p342 = pneg %p89
      %p343 = pneg %p86
      %p344 = pneg %p110
      %p345 = pneg %p107
      %p346 = pneg %p131
      %p347 = pneg %p128
      %p348 = pneg %p152
      %p349 = pneg %p149
      %p350 = pneg %p173
      %p351 = pneg %p170
      %p352 = pneg %p194
      %p353 = pneg %p191
      %p354 = pneg %p215
      %p355 = pneg %p212
      %p356 = pneg %p236
      %p357 = pneg %p233
      %p358 = pneg %p262
      %p359 = pneg %p259
      %p360 = scmp.lt.s32.totalorder %s21, 1
      %s361 = scalar_select %p360, %s21, 1
      %s362 = smul.addr %s361, 4
      %s363 = smul.addr %s362, 8
      %s364 = scalar_lea.vmem %s10, %s363
      %p365 = scmp.lt.s32.totalorder %s21, 1
      %s366 = scalar_select %p365, %s21, 1
      %s367 = smul.addr %s366, 4
      %s368 = smul.addr %s367, 8
      %s369 = scalar_lea.vmem %s0, %s368
      %p370 = scmp.lt.s32.totalorder %s21, 1
      %s371 = scalar_select %p370, %s21, 1
      %s372 = smul.addr %s371, 4
      %s373 = smul.addr %s372, 8
      %s374 = scalar_lea.vmem %s1, %s373
      %p375 = scmp.lt.s32.totalorder %s21, 1
      %s376 = scalar_select %p375, %s21, 1
      %s377 = smul.addr %s376, 4
      %s378 = smul.addr %s377, 8
      %s379 = scalar_lea.vmem %s10, %s378
      %v380 = vld [vmem:[%s369] sm:$0xff]
      %v381 = vld [vmem:[%s369 + $0x8] sm:$0xff]
      %v382 = vld [vmem:[%s369 + $0x10] sm:$0xff]
      %v383 = vld [vmem:[%s369 + $0x18] sm:$0xff]
      %v384 = vld [vmem:[%s374] sm:$0xff]
      %v385 = vld [vmem:[%s374 + $0x8] sm:$0xff]
      %v386 = vld [vmem:[%s374 + $0x10] sm:$0xff]
      %v387 = vld [vmem:[%s374 + $0x18] sm:$0xff]
      %s388 = scalar_lea.vmem %s2, 512
      %v389 = vld [vmem:[%s388] sm:$0xff]
      %v390 = vld [vmem:[%s388 + $0x8] sm:$0xff]
      %v391 = vld [vmem:[%s388 + $0x10] sm:$0xff]
      %v392 = vld [vmem:[%s388 + $0x18] sm:$0xff]
      %v393 = vld [vmem:[%s388 + $0x20] sm:$0xff]
      %v394 = vld [vmem:[%s388 + $0x28] sm:$0xff]
      %v395 = vld [vmem:[%s388 + $0x30] sm:$0xff]
      %v396 = vld [vmem:[%s388 + $0x38] sm:$0xff]
      %v397 = vld [vmem:[%s388 + $0x40] sm:$0xff]
      %v398 = vld [vmem:[%s388 + $0x48] sm:$0xff]
      %v399 = vld [vmem:[%s388 + $0x50] sm:$0xff]
      %v400 = vld [vmem:[%s388 + $0x58] sm:$0xff]
      %v401 = vld [vmem:[%s388 + $0x60] sm:$0xff]
      %v402 = vld [vmem:[%s388 + $0x68] sm:$0xff]
      %v403 = vld [vmem:[%s388 + $0x70] sm:$0xff]
      %v404 = vld [vmem:[%s388 + $0x78] sm:$0xff]
      %v405 = vld [vmem:[%s388 + $0x80] sm:$0xff]
      %v406 = vld [vmem:[%s388 + $0x88] sm:$0xff]
      %v407 = vld [vmem:[%s388 + $0x90] sm:$0xff]
      %v408 = vld [vmem:[%s388 + $0x98] sm:$0xff]
      %v409 = vld [vmem:[%s388 + $0xa0] sm:$0xff]
      %v410 = vld [vmem:[%s388 + $0xa8] sm:$0xff]
      %v411 = vld [vmem:[%s388 + $0xb0] sm:$0xff]
      %v412 = vld [vmem:[%s388 + $0xb8] sm:$0xff]
      %v413 = vld [vmem:[%s388 + $0xc0] sm:$0xff]
      %v414 = vld [vmem:[%s388 + $0xc8] sm:$0xff]
      %v415 = vld [vmem:[%s388 + $0xd0] sm:$0xff]
      %v416 = vld [vmem:[%s388 + $0xd8] sm:$0xff]
      %v417 = vld [vmem:[%s388 + $0xe0] sm:$0xff]
      %v418 = vld [vmem:[%s388 + $0xe8] sm:$0xff]
      %v419 = vld [vmem:[%s388 + $0xf0] sm:$0xff]
      %v420 = vld [vmem:[%s388 + $0xf8] sm:$0xff]
      %v421 = vld [vmem:[%s388 + $0x100] sm:$0xff]
      %v422 = vld [vmem:[%s388 + $0x108] sm:$0xff]
      %v423 = vld [vmem:[%s388 + $0x110] sm:$0xff]
      %v424 = vld [vmem:[%s388 + $0x118] sm:$0xff]
      %v425 = vld [vmem:[%s388 + $0x120] sm:$0xff]
      %v426 = vld [vmem:[%s388 + $0x128] sm:$0xff]
      %v427 = vld [vmem:[%s388 + $0x130] sm:$0xff]
      %v428 = vld [vmem:[%s388 + $0x138] sm:$0xff]
      %v429 = vld [vmem:[%s388 + $0x140] sm:$0xff]
      %v430 = vld [vmem:[%s388 + $0x148] sm:$0xff]
      %v431 = vld [vmem:[%s388 + $0x150] sm:$0xff]
      %v432 = vld [vmem:[%s388 + $0x158] sm:$0xff]
      %v433 = vld [vmem:[%s388 + $0x160] sm:$0xff]
      %v434 = vld [vmem:[%s388 + $0x168] sm:$0xff]
      %v435 = vld [vmem:[%s388 + $0x170] sm:$0xff]
      %v436 = vld [vmem:[%s388 + $0x178] sm:$0xff]
      %v437 = vld [vmem:[%s388 + $0x180] sm:$0xff]
      %v438 = vld [vmem:[%s388 + $0x188] sm:$0xff]
      %v439 = vld [vmem:[%s388 + $0x190] sm:$0xff]
      %v440 = vld [vmem:[%s388 + $0x198] sm:$0xff]
      %v441 = vld [vmem:[%s388 + $0x1a0] sm:$0xff]
      %v442 = vld [vmem:[%s388 + $0x1a8] sm:$0xff]
      %v443 = vld [vmem:[%s388 + $0x1b0] sm:$0xff]
      %v444 = vld [vmem:[%s388 + $0x1b8] sm:$0xff]
      %v445 = vld [vmem:[%s388 + $0x1c0] sm:$0xff]
      %v446 = vld [vmem:[%s388 + $0x1c8] sm:$0xff]
      %v447 = vld [vmem:[%s388 + $0x1d0] sm:$0xff]
      %v448 = vld [vmem:[%s388 + $0x1d8] sm:$0xff]
      %v449 = vld [vmem:[%s388 + $0x1e0] sm:$0xff]
      %v450 = vld [vmem:[%s388 + $0x1e8] sm:$0xff]
      %v451 = vld [vmem:[%s388 + $0x1f0] sm:$0xff]
      %v452 = vld [vmem:[%s388 + $0x1f8] sm:$0xff]
      %s453 = scalar_lea.vmem %s3, 512
      %v454 = vld [vmem:[%s453] sm:$0xff]
      %v455 = vld [vmem:[%s453 + $0x8] sm:$0xff]
      %v456 = vld [vmem:[%s453 + $0x10] sm:$0xff]
      %v457 = vld [vmem:[%s453 + $0x18] sm:$0xff]
      %v458 = vld [vmem:[%s453 + $0x20] sm:$0xff]
      %v459 = vld [vmem:[%s453 + $0x28] sm:$0xff]
      %v460 = vld [vmem:[%s453 + $0x30] sm:$0xff]
      %v461 = vld [vmem:[%s453 + $0x38] sm:$0xff]
      %v462 = vld [vmem:[%s453 + $0x40] sm:$0xff]
      %v463 = vld [vmem:[%s453 + $0x48] sm:$0xff]
      %v464 = vld [vmem:[%s453 + $0x50] sm:$0xff]
      %v465 = vld [vmem:[%s453 + $0x58] sm:$0xff]
      %v466 = vld [vmem:[%s453 + $0x60] sm:$0xff]
      %v467 = vld [vmem:[%s453 + $0x68] sm:$0xff]
      %v468 = vld [vmem:[%s453 + $0x70] sm:$0xff]
      %v469 = vld [vmem:[%s453 + $0x78] sm:$0xff]
      %v470 = vld [vmem:[%s453 + $0x80] sm:$0xff]
      %v471 = vld [vmem:[%s453 + $0x88] sm:$0xff]
      %v472 = vld [vmem:[%s453 + $0x90] sm:$0xff]
      %v473 = vld [vmem:[%s453 + $0x98] sm:$0xff]
      %v474 = vld [vmem:[%s453 + $0xa0] sm:$0xff]
      %v475 = vld [vmem:[%s453 + $0xa8] sm:$0xff]
      %v476 = vld [vmem:[%s453 + $0xb0] sm:$0xff]
      %v477 = vld [vmem:[%s453 + $0xb8] sm:$0xff]
      %v478 = vld [vmem:[%s453 + $0xc0] sm:$0xff]
      %v479 = vld [vmem:[%s453 + $0xc8] sm:$0xff]
      %v480 = vld [vmem:[%s453 + $0xd0] sm:$0xff]
      %v481 = vld [vmem:[%s453 + $0xd8] sm:$0xff]
      %v482 = vld [vmem:[%s453 + $0xe0] sm:$0xff]
      %v483 = vld [vmem:[%s453 + $0xe8] sm:$0xff]
      %v484 = vld [vmem:[%s453 + $0xf0] sm:$0xff]
      %v485 = vld [vmem:[%s453 + $0xf8] sm:$0xff]
      %v486 = vld [vmem:[%s453 + $0x100] sm:$0xff]
      %v487 = vld [vmem:[%s453 + $0x108] sm:$0xff]
      %v488 = vld [vmem:[%s453 + $0x110] sm:$0xff]
      %v489 = vld [vmem:[%s453 + $0x118] sm:$0xff]
      %v490 = vld [vmem:[%s453 + $0x120] sm:$0xff]
      %v491 = vld [vmem:[%s453 + $0x128] sm:$0xff]
      %v492 = vld [vmem:[%s453 + $0x130] sm:$0xff]
      %v493 = vld [vmem:[%s453 + $0x138] sm:$0xff]
      %v494 = vld [vmem:[%s453 + $0x140] sm:$0xff]
      %v495 = vld [vmem:[%s453 + $0x148] sm:$0xff]
      %v496 = vld [vmem:[%s453 + $0x150] sm:$0xff]
      %v497 = vld [vmem:[%s453 + $0x158] sm:$0xff]
      %v498 = vld [vmem:[%s453 + $0x160] sm:$0xff]
      %v499 = vld [vmem:[%s453 + $0x168] sm:$0xff]
      %v500 = vld [vmem:[%s453 + $0x170] sm:$0xff]
      %v501 = vld [vmem:[%s453 + $0x178] sm:$0xff]
      %v502 = vld [vmem:[%s453 + $0x180] sm:$0xff]
      %v503 = vld [vmem:[%s453 + $0x188] sm:$0xff]
      %v504 = vld [vmem:[%s453 + $0x190] sm:$0xff]
      %v505 = vld [vmem:[%s453 + $0x198] sm:$0xff]
      %v506 = vld [vmem:[%s453 + $0x1a0] sm:$0xff]
      %v507 = vld [vmem:[%s453 + $0x1a8] sm:$0xff]
      %v508 = vld [vmem:[%s453 + $0x1b0] sm:$0xff]
      %v509 = vld [vmem:[%s453 + $0x1b8] sm:$0xff]
      %v510 = vld [vmem:[%s453 + $0x1c0] sm:$0xff]
      %v511 = vld [vmem:[%s453 + $0x1c8] sm:$0xff]
      %v512 = vld [vmem:[%s453 + $0x1d0] sm:$0xff]
      %v513 = vld [vmem:[%s453 + $0x1d8] sm:$0xff]
      %v514 = vld [vmem:[%s453 + $0x1e0] sm:$0xff]
      %v515 = vld [vmem:[%s453 + $0x1e8] sm:$0xff]
      %v516 = vld [vmem:[%s453 + $0x1f0] sm:$0xff]
      %v517 = vld [vmem:[%s453 + $0x1f8] sm:$0xff]
      %518 = vmatprep.subr.mxu0 %v485
      %519 = vmatpush1.msra.mxu0 %v484
      %520 = vmatprep.subr.mxu0 %v483
      %521 = vmatpush1.msra.mxu0 %v482
      %522 = vmatprep.subr.mxu0 %v481
      %523 = vmatpush1.msra.mxu0 %v480
      %524 = vmatprep.subr.mxu0 %v479
      %525 = vmatpush1.msra.mxu0 %v478
      %526 = vmatprep.subr.mxu0 %v477
      %527 = vmatpush1.msra.mxu0 %v476
      %528 = vmatprep.subr.mxu0 %v475
      %529 = vmatpush1.msra.mxu0 %v474
      %530 = vmatprep.subr.mxu0 %v473
      %531 = vmatpush1.msra.mxu0 %v472
      %532 = vmatprep.subr.mxu0 %v471
      %533 = vmatpush1.msra.mxu0 %v470
      %534 = vmatprep.subr.mxu0 %v469
      %535 = vmatpush1.msra.mxu0 %v468
      %536 = vmatprep.subr.mxu0 %v467
      %537 = vmatpush1.msra.mxu0 %v466
      %538 = vmatprep.subr.mxu0 %v465
      %539 = vmatpush1.msra.mxu0 %v464
      %540 = vmatprep.subr.mxu0 %v463
      %541 = vmatpush1.msra.mxu0 %v462
      %542 = vmatprep.subr.mxu0 %v461
      %543 = vmatpush1.msra.mxu0 %v460
      %544 = vmatprep.subr.mxu0 %v459
      %545 = vmatpush1.msra.mxu0 %v458
      %546 = vmatprep.subr.mxu0 %v457
      %547 = vmatpush1.msra.mxu0 %v456
      %548 = vmatprep.subr.mxu0 %v455
      %549 = vmatpush1.msra.mxu0 %v454
      %550 = vmatprep.subr.mxu0 %v517
      %551 = vmatpush2.msra.mxu0 %v516
      %552 = vmatprep.subr.mxu0 %v515
      %553 = vmatpush2.msra.mxu0 %v514
      %554 = vmatprep.subr.mxu0 %v513
      %555 = vmatpush2.msra.mxu0 %v512
      %556 = vmatprep.subr.mxu0 %v511
      %557 = vmatpush2.msra.mxu0 %v510
      %558 = vmatprep.subr.mxu0 %v509
      %559 = vmatpush2.msra.mxu0 %v508
      %560 = vmatprep.subr.mxu0 %v507
      %561 = vmatpush2.msra.mxu0 %v506
      %562 = vmatprep.subr.mxu0 %v505
      %563 = vmatpush2.msra.mxu0 %v504
      %564 = vmatprep.subr.mxu0 %v503
      %565 = vmatpush2.msra.mxu0 %v502
      %566 = vmatprep.subr.mxu0 %v501
      %567 = vmatpush2.msra.mxu0 %v500
      %568 = vmatprep.subr.mxu0 %v499
      %569 = vmatpush2.msra.mxu0 %v498
      %570 = vmatprep.subr.mxu0 %v497
      %571 = vmatpush2.msra.mxu0 %v496
      %572 = vmatprep.subr.mxu0 %v495
      %573 = vmatpush2.msra.mxu0 %v494
      %574 = vmatprep.subr.mxu0 %v493
      %575 = vmatpush2.msra.mxu0 %v492
      %576 = vmatprep.subr.mxu0 %v491
      %577 = vmatpush2.msra.mxu0 %v490
      %578 = vmatprep.subr.mxu0 %v489
      %579 = vmatpush2.msra.mxu0 %v488
      %580 = vmatprep.subr.mxu0 %v487
      %581 = vmatpush2.msra.mxu0 %v486
      %582 = vmatprep.mubr.f32.mxu0 %v385
      %583 = vmatmul.mubr.f32.gmra.mxu0 %v384
      %v584 = vpop.f32.mrf.mxu0
      %v585 = vadd.f32 0.0, %v584
      %v586 = vpop.f32.mrf.mxu0
      %v587 = vadd.f32 0.0, %v586
      %588 = vmatprep.mubr.f32.mxu0 %v387
      %589 = vmatmul.mubr.f32.gmra.mxu0 %v386
      %v590 = vpop.f32.mrf.mxu0
      %v591 = vadd.f32 0.0, %v590
      %v592 = vpop.f32.mrf.mxu0
      %v593 = vadd.f32 0.0, %v592
      %594 = vdwg.mxu0
      %595 = vmatprep.subr.mxu0 %v420
      %596 = vmatpush1.msra.mxu0 %v419
      %597 = vmatprep.subr.mxu0 %v418
      %598 = vmatpush1.msra.mxu0 %v417
      %599 = vmatprep.subr.mxu0 %v416
      %600 = vmatpush1.msra.mxu0 %v415
      %601 = vmatprep.subr.mxu0 %v414
      %602 = vmatpush1.msra.mxu0 %v413
      %603 = vmatprep.subr.mxu0 %v412
      %604 = vmatpush1.msra.mxu0 %v411
      %605 = vmatprep.subr.mxu0 %v410
      %606 = vmatpush1.msra.mxu0 %v409
      %607 = vmatprep.subr.mxu0 %v408
      %608 = vmatpush1.msra.mxu0 %v407
      %609 = vmatprep.subr.mxu0 %v406
      %610 = vmatpush1.msra.mxu0 %v405
      %611 = vmatprep.subr.mxu0 %v404
      %612 = vmatpush1.msra.mxu0 %v403
      %613 = vmatprep.subr.mxu0 %v402
      %614 = vmatpush1.msra.mxu0 %v401
      %615 = vmatprep.subr.mxu0 %v400
      %616 = vmatpush1.msra.mxu0 %v399
      %617 = vmatprep.subr.mxu0 %v398
      %618 = vmatpush1.msra.mxu0 %v397
      %619 = vmatprep.subr.mxu0 %v396
      %620 = vmatpush1.msra.mxu0 %v395
      %621 = vmatprep.subr.mxu0 %v394
      %622 = vmatpush1.msra.mxu0 %v393
      %623 = vmatprep.subr.mxu0 %v392
      %624 = vmatpush1.msra.mxu0 %v391
      %625 = vmatprep.subr.mxu0 %v390
      %626 = vmatpush1.msra.mxu0 %v389
      %627 = vmatprep.subr.mxu0 %v452
      %628 = vmatpush2.msra.mxu0 %v451
      %629 = vmatprep.subr.mxu0 %v450
      %630 = vmatpush2.msra.mxu0 %v449
      %631 = vmatprep.subr.mxu0 %v448
      %632 = vmatpush2.msra.mxu0 %v447
      %633 = vmatprep.subr.mxu0 %v446
      %634 = vmatpush2.msra.mxu0 %v445
      %635 = vmatprep.subr.mxu0 %v444
      %636 = vmatpush2.msra.mxu0 %v443
      %637 = vmatprep.subr.mxu0 %v442
      %638 = vmatpush2.msra.mxu0 %v441
      %639 = vmatprep.subr.mxu0 %v440
      %640 = vmatpush2.msra.mxu0 %v439
      %641 = vmatprep.subr.mxu0 %v438
      %642 = vmatpush2.msra.mxu0 %v437
      %643 = vmatprep.subr.mxu0 %v436
      %644 = vmatpush2.msra.mxu0 %v435
      %645 = vmatprep.subr.mxu0 %v434
      %646 = vmatpush2.msra.mxu0 %v433
      %647 = vmatprep.subr.mxu0 %v432
      %648 = vmatpush2.msra.mxu0 %v431
      %649 = vmatprep.subr.mxu0 %v430
      %650 = vmatpush2.msra.mxu0 %v429
      %651 = vmatprep.subr.mxu0 %v428
      %652 = vmatpush2.msra.mxu0 %v427
      %653 = vmatprep.subr.mxu0 %v426
      %654 = vmatpush2.msra.mxu0 %v425
      %655 = vmatprep.subr.mxu0 %v424
      %656 = vmatpush2.msra.mxu0 %v423
      %657 = vmatprep.subr.mxu0 %v422
      %658 = vmatpush2.msra.mxu0 %v421
      %659 = vmatprep.mubr.f32.mxu0 %v381
      %660 = vmatmul.mubr.f32.gmra.mxu0 %v380
      %v661 = vpop.f32.mrf.mxu0
      %v662 = vadd.f32 %v585, %v661
      %v663 = vpop.f32.mrf.mxu0
      %v664 = vadd.f32 %v587, %v663
      %665 = vmatprep.mubr.f32.mxu0 %v383
      %666 = vmatmul.mubr.f32.gmra.mxu0 %v382
      %v667 = vpop.f32.mrf.mxu0
      %v668 = vadd.f32 %v591, %v667
      %v669 = vpop.f32.mrf.mxu0
      %v670 = vadd.f32 %v593, %v669
      %671 = vdwg.mxu0
      %v672 = vld [vmem:[%s2] sm:$0xff]
      %v673 = vld [vmem:[%s2 + $0x8] sm:$0xff]
      %v674 = vld [vmem:[%s2 + $0x10] sm:$0xff]
      %v675 = vld [vmem:[%s2 + $0x18] sm:$0xff]
      %v676 = vld [vmem:[%s2 + $0x20] sm:$0xff]
      %v677 = vld [vmem:[%s2 + $0x28] sm:$0xff]
      %v678 = vld [vmem:[%s2 + $0x30] sm:$0xff]
      %v679 = vld [vmem:[%s2 + $0x38] sm:$0xff]
      %v680 = vld [vmem:[%s2 + $0x40] sm:$0xff]
      %v681 = vld [vmem:[%s2 + $0x48] sm:$0xff]
      %v682 = vld [vmem:[%s2 + $0x50] sm:$0xff]
      %v683 = vld [vmem:[%s2 + $0x58] sm:$0xff]
      %v684 = vld [vmem:[%s2 + $0x60] sm:$0xff]
      %v685 = vld [vmem:[%s2 + $0x68] sm:$0xff]
      %v686 = vld [vmem:[%s2 + $0x70] sm:$0xff]
      %v687 = vld [vmem:[%s2 + $0x78] sm:$0xff]
      %v688 = vld [vmem:[%s2 + $0x80] sm:$0xff]
      %v689 = vld [vmem:[%s2 + $0x88] sm:$0xff]
      %v690 = vld [vmem:[%s2 + $0x90] sm:$0xff]
      %v691 = vld [vmem:[%s2 + $0x98] sm:$0xff]
      %v692 = vld [vmem:[%s2 + $0xa0] sm:$0xff]
      %v693 = vld [vmem:[%s2 + $0xa8] sm:$0xff]
      %v694 = vld [vmem:[%s2 + $0xb0] sm:$0xff]
      %v695 = vld [vmem:[%s2 + $0xb8] sm:$0xff]
      %v696 = vld [vmem:[%s2 + $0xc0] sm:$0xff]
      %v697 = vld [vmem:[%s2 + $0xc8] sm:$0xff]
      %v698 = vld [vmem:[%s2 + $0xd0] sm:$0xff]
      %v699 = vld [vmem:[%s2 + $0xd8] sm:$0xff]
      %v700 = vld [vmem:[%s2 + $0xe0] sm:$0xff]
      %v701 = vld [vmem:[%s2 + $0xe8] sm:$0xff]
      %v702 = vld [vmem:[%s2 + $0xf0] sm:$0xff]
      %v703 = vld [vmem:[%s2 + $0xf8] sm:$0xff]
      %v704 = vld [vmem:[%s2 + $0x100] sm:$0xff]
      %v705 = vld [vmem:[%s2 + $0x108] sm:$0xff]
      %v706 = vld [vmem:[%s2 + $0x110] sm:$0xff]
      %v707 = vld [vmem:[%s2 + $0x118] sm:$0xff]
      %v708 = vld [vmem:[%s2 + $0x120] sm:$0xff]
      %v709 = vld [vmem:[%s2 + $0x128] sm:$0xff]
      %v710 = vld [vmem:[%s2 + $0x130] sm:$0xff]
      %v711 = vld [vmem:[%s2 + $0x138] sm:$0xff]
      %v712 = vld [vmem:[%s2 + $0x140] sm:$0xff]
      %v713 = vld [vmem:[%s2 + $0x148] sm:$0xff]
      %v714 = vld [vmem:[%s2 + $0x150] sm:$0xff]
      %v715 = vld [vmem:[%s2 + $0x158] sm:$0xff]
      %v716 = vld [vmem:[%s2 + $0x160] sm:$0xff]
      %v717 = vld [vmem:[%s2 + $0x168] sm:$0xff]
      %v718 = vld [vmem:[%s2 + $0x170] sm:$0xff]
      %v719 = vld [vmem:[%s2 + $0x178] sm:$0xff]
      %v720 = vld [vmem:[%s2 + $0x180] sm:$0xff]
      %v721 = vld [vmem:[%s2 + $0x188] sm:$0xff]
      %v722 = vld [vmem:[%s2 + $0x190] sm:$0xff]
      %v723 = vld [vmem:[%s2 + $0x198] sm:$0xff]
      %v724 = vld [vmem:[%s2 + $0x1a0] sm:$0xff]
      %v725 = vld [vmem:[%s2 + $0x1a8] sm:$0xff]
      %v726 = vld [vmem:[%s2 + $0x1b0] sm:$0xff]
      %v727 = vld [vmem:[%s2 + $0x1b8] sm:$0xff]
      %v728 = vld [vmem:[%s2 + $0x1c0] sm:$0xff]
      %v729 = vld [vmem:[%s2 + $0x1c8] sm:$0xff]
      %v730 = vld [vmem:[%s2 + $0x1d0] sm:$0xff]
      %v731 = vld [vmem:[%s2 + $0x1d8] sm:$0xff]
      %v732 = vld [vmem:[%s2 + $0x1e0] sm:$0xff]
      %v733 = vld [vmem:[%s2 + $0x1e8] sm:$0xff]
      %v734 = vld [vmem:[%s2 + $0x1f0] sm:$0xff]
      %v735 = vld [vmem:[%s2 + $0x1f8] sm:$0xff]
      %v736 = vld [vmem:[%s3] sm:$0xff]
      %v737 = vld [vmem:[%s3 + $0x8] sm:$0xff]
      %v738 = vld [vmem:[%s3 + $0x10] sm:$0xff]
      %v739 = vld [vmem:[%s3 + $0x18] sm:$0xff]
      %v740 = vld [vmem:[%s3 + $0x20] sm:$0xff]
      %v741 = vld [vmem:[%s3 + $0x28] sm:$0xff]
      %v742 = vld [vmem:[%s3 + $0x30] sm:$0xff]
      %v743 = vld [vmem:[%s3 + $0x38] sm:$0xff]
      %v744 = vld [vmem:[%s3 + $0x40] sm:$0xff]
      %v745 = vld [vmem:[%s3 + $0x48] sm:$0xff]
      %v746 = vld [vmem:[%s3 + $0x50] sm:$0xff]
      %v747 = vld [vmem:[%s3 + $0x58] sm:$0xff]
      %v748 = vld [vmem:[%s3 + $0x60] sm:$0xff]
      %v749 = vld [vmem:[%s3 + $0x68] sm:$0xff]
      %v750 = vld [vmem:[%s3 + $0x70] sm:$0xff]
      %v751 = vld [vmem:[%s3 + $0x78] sm:$0xff]
      %v752 = vld [vmem:[%s3 + $0x80] sm:$0xff]
      %v753 = vld [vmem:[%s3 + $0x88] sm:$0xff]
      %v754 = vld [vmem:[%s3 + $0x90] sm:$0xff]
      %v755 = vld [vmem:[%s3 + $0x98] sm:$0xff]
      %v756 = vld [vmem:[%s3 + $0xa0] sm:$0xff]
      %v757 = vld [vmem:[%s3 + $0xa8] sm:$0xff]
      %v758 = vld [vmem:[%s3 + $0xb0] sm:$0xff]
      %v759 = vld [vmem:[%s3 + $0xb8] sm:$0xff]
      %v760 = vld [vmem:[%s3 + $0xc0] sm:$0xff]
      %v761 = vld [vmem:[%s3 + $0xc8] sm:$0xff]
      %v762 = vld [vmem:[%s3 + $0xd0] sm:$0xff]
      %v763 = vld [vmem:[%s3 + $0xd8] sm:$0xff]
      %v764 = vld [vmem:[%s3 + $0xe0] sm:$0xff]
      %v765 = vld [vmem:[%s3 + $0xe8] sm:$0xff]
      %v766 = vld [vmem:[%s3 + $0xf0] sm:$0xff]
      %v767 = vld [vmem:[%s3 + $0xf8] sm:$0xff]
      %v768 = vld [vmem:[%s3 + $0x100] sm:$0xff]
      %v769 = vld [vmem:[%s3 + $0x108] sm:$0xff]
      %v770 = vld [vmem:[%s3 + $0x110] sm:$0xff]
      %v771 = vld [vmem:[%s3 + $0x118] sm:$0xff]
      %v772 = vld [vmem:[%s3 + $0x120] sm:$0xff]
      %v773 = vld [vmem:[%s3 + $0x128] sm:$0xff]
      %v774 = vld [vmem:[%s3 + $0x130] sm:$0xff]
      %v775 = vld [vmem:[%s3 + $0x138] sm:$0xff]
      %v776 = vld [vmem:[%s3 + $0x140] sm:$0xff]
      %v777 = vld [vmem:[%s3 + $0x148] sm:$0xff]
      %v778 = vld [vmem:[%s3 + $0x150] sm:$0xff]
      %v779 = vld [vmem:[%s3 + $0x158] sm:$0xff]
      %v780 = vld [vmem:[%s3 + $0x160] sm:$0xff]
      %v781 = vld [vmem:[%s3 + $0x168] sm:$0xff]
      %v782 = vld [vmem:[%s3 + $0x170] sm:$0xff]
      %v783 = vld [vmem:[%s3 + $0x178] sm:$0xff]
      %v784 = vld [vmem:[%s3 + $0x180] sm:$0xff]
      %v785 = vld [vmem:[%s3 + $0x188] sm:$0xff]
      %v786 = vld [vmem:[%s3 + $0x190] sm:$0xff]
      %v787 = vld [vmem:[%s3 + $0x198] sm:$0xff]
      %v788 = vld [vmem:[%s3 + $0x1a0] sm:$0xff]
      %v789 = vld [vmem:[%s3 + $0x1a8] sm:$0xff]
      %v790 = vld [vmem:[%s3 + $0x1b0] sm:$0xff]
      %v791 = vld [vmem:[%s3 + $0x1b8] sm:$0xff]
      %v792 = vld [vmem:[%s3 + $0x1c0] sm:$0xff]
      %v793 = vld [vmem:[%s3 + $0x1c8] sm:$0xff]
      %v794 = vld [vmem:[%s3 + $0x1d0] sm:$0xff]
      %v795 = vld [vmem:[%s3 + $0x1d8] sm:$0xff]
      %v796 = vld [vmem:[%s3 + $0x1e0] sm:$0xff]
      %v797 = vld [vmem:[%s3 + $0x1e8] sm:$0xff]
      %v798 = vld [vmem:[%s3 + $0x1f0] sm:$0xff]
      %v799 = vld [vmem:[%s3 + $0x1f8] sm:$0xff]
      %800 = vmatprep.subr.mxu0 %v767
      %801 = vmatpush1.msra.mxu0 %v766
      %802 = vmatprep.subr.mxu0 %v765
      %803 = vmatpush1.msra.mxu0 %v764
      %804 = vmatprep.subr.mxu0 %v763
      %805 = vmatpush1.msra.mxu0 %v762
      %806 = vmatprep.subr.mxu0 %v761
      %807 = vmatpush1.msra.mxu0 %v760
      %808 = vmatprep.subr.mxu0 %v759
      %809 = vmatpush1.msra.mxu0 %v758
      %810 = vmatprep.subr.mxu0 %v757
      %811 = vmatpush1.msra.mxu0 %v756
      %812 = vmatprep.subr.mxu0 %v755
      %813 = vmatpush1.msra.mxu0 %v754
      %814 = vmatprep.subr.mxu0 %v753
      %815 = vmatpush1.msra.mxu0 %v752
      %816 = vmatprep.subr.mxu0 %v751
      %817 = vmatpush1.msra.mxu0 %v750
      %818 = vmatprep.subr.mxu0 %v749
      %819 = vmatpush1.msra.mxu0 %v748
      %820 = vmatprep.subr.mxu0 %v747
      %821 = vmatpush1.msra.mxu0 %v746
      %822 = vmatprep.subr.mxu0 %v745
      %823 = vmatpush1.msra.mxu0 %v744
      %824 = vmatprep.subr.mxu0 %v743
      %825 = vmatpush1.msra.mxu0 %v742
      %826 = vmatprep.subr.mxu0 %v741
      %827 = vmatpush1.msra.mxu0 %v740
      %828 = vmatprep.subr.mxu0 %v739
      %829 = vmatpush1.msra.mxu0 %v738
      %830 = vmatprep.subr.mxu0 %v737
      %831 = vmatpush1.msra.mxu0 %v736
      %832 = vmatprep.subr.mxu0 %v799
      %833 = vmatpush2.msra.mxu0 %v798
      %834 = vmatprep.subr.mxu0 %v797
      %835 = vmatpush2.msra.mxu0 %v796
      %836 = vmatprep.subr.mxu0 %v795
      %837 = vmatpush2.msra.mxu0 %v794
      %838 = vmatprep.subr.mxu0 %v793
      %839 = vmatpush2.msra.mxu0 %v792
      %840 = vmatprep.subr.mxu0 %v791
      %841 = vmatpush2.msra.mxu0 %v790
      %842 = vmatprep.subr.mxu0 %v789
      %843 = vmatpush2.msra.mxu0 %v788
      %844 = vmatprep.subr.mxu0 %v787
      %845 = vmatpush2.msra.mxu0 %v786
      %846 = vmatprep.subr.mxu0 %v785
      %847 = vmatpush2.msra.mxu0 %v784
      %848 = vmatprep.subr.mxu0 %v783
      %849 = vmatpush2.msra.mxu0 %v782
      %850 = vmatprep.subr.mxu0 %v781
      %851 = vmatpush2.msra.mxu0 %v780
      %852 = vmatprep.subr.mxu0 %v779
      %853 = vmatpush2.msra.mxu0 %v778
      %854 = vmatprep.subr.mxu0 %v777
      %855 = vmatpush2.msra.mxu0 %v776
      %856 = vmatprep.subr.mxu0 %v775
      %857 = vmatpush2.msra.mxu0 %v774
      %858 = vmatprep.subr.mxu0 %v773
      %859 = vmatpush2.msra.mxu0 %v772
      %860 = vmatprep.subr.mxu0 %v771
      %861 = vmatpush2.msra.mxu0 %v770
      %862 = vmatprep.subr.mxu0 %v769
      %863 = vmatpush2.msra.mxu0 %v768
      %864 = vmatprep.mubr.f32.mxu0 %v385
      %865 = vmatmul.mubr.f32.gmra.mxu0 %v384
      %v866 = vpop.f32.mrf.mxu0
      %v867 = vadd.f32 0.0, %v866
      %v868 = vpop.f32.mrf.mxu0
      %v869 = vadd.f32 0.0, %v868
      %870 = vmatprep.mubr.f32.mxu0 %v387
      %871 = vmatmul.mubr.f32.gmra.mxu0 %v386
      %v872 = vpop.f32.mrf.mxu0
      %v873 = vadd.f32 0.0, %v872
      %v874 = vpop.f32.mrf.mxu0
      %v875 = vadd.f32 0.0, %v874
      %876 = vdwg.mxu0
      %877 = vmatprep.subr.mxu0 %v703
      %878 = vmatpush1.msra.mxu0 %v702
      %879 = vmatprep.subr.mxu0 %v701
      %880 = vmatpush1.msra.mxu0 %v700
      %881 = vmatprep.subr.mxu0 %v699
      %882 = vmatpush1.msra.mxu0 %v698
      %883 = vmatprep.subr.mxu0 %v697
      %884 = vmatpush1.msra.mxu0 %v696
      %885 = vmatprep.subr.mxu0 %v695
      %886 = vmatpush1.msra.mxu0 %v694
      %887 = vmatprep.subr.mxu0 %v693
      %888 = vmatpush1.msra.mxu0 %v692
      %889 = vmatprep.subr.mxu0 %v691
      %890 = vmatpush1.msra.mxu0 %v690
      %891 = vmatprep.subr.mxu0 %v689
      %892 = vmatpush1.msra.mxu0 %v688
      %893 = vmatprep.subr.mxu0 %v687
      %894 = vmatpush1.msra.mxu0 %v686
      %895 = vmatprep.subr.mxu0 %v685
      %896 = vmatpush1.msra.mxu0 %v684
      %897 = vmatprep.subr.mxu0 %v683
      %898 = vmatpush1.msra.mxu0 %v682
      %899 = vmatprep.subr.mxu0 %v681
      %900 = vmatpush1.msra.mxu0 %v680
      %901 = vmatprep.subr.mxu0 %v679
      %902 = vmatpush1.msra.mxu0 %v678
      %903 = vmatprep.subr.mxu0 %v677
      %904 = vmatpush1.msra.mxu0 %v676
      %905 = vmatprep.subr.mxu0 %v675
      %906 = vmatpush1.msra.mxu0 %v674
      %907 = vmatprep.subr.mxu0 %v673
      %908 = vmatpush1.msra.mxu0 %v672
      %909 = vmatprep.subr.mxu0 %v735
      %910 = vmatpush2.msra.mxu0 %v734
      %911 = vmatprep.subr.mxu0 %v733
      %912 = vmatpush2.msra.mxu0 %v732
      %913 = vmatprep.subr.mxu0 %v731
      %914 = vmatpush2.msra.mxu0 %v730
      %915 = vmatprep.subr.mxu0 %v729
      %916 = vmatpush2.msra.mxu0 %v728
      %917 = vmatprep.subr.mxu0 %v727
      %918 = vmatpush2.msra.mxu0 %v726
      %919 = vmatprep.subr.mxu0 %v725
      %920 = vmatpush2.msra.mxu0 %v724
      %921 = vmatprep.subr.mxu0 %v723
      %922 = vmatpush2.msra.mxu0 %v722
      %923 = vmatprep.subr.mxu0 %v721
      %924 = vmatpush2.msra.mxu0 %v720
      %925 = vmatprep.subr.mxu0 %v719
      %926 = vmatpush2.msra.mxu0 %v718
      %927 = vmatprep.subr.mxu0 %v717
      %928 = vmatpush2.msra.mxu0 %v716
      %929 = vmatprep.subr.mxu0 %v715
      %930 = vmatpush2.msra.mxu0 %v714
      %931 = vmatprep.subr.mxu0 %v713
      %932 = vmatpush2.msra.mxu0 %v712
      %933 = vmatprep.subr.mxu0 %v711
      %934 = vmatpush2.msra.mxu0 %v710
      %935 = vmatprep.subr.mxu0 %v709
      %936 = vmatpush2.msra.mxu0 %v708
      %937 = vmatprep.subr.mxu0 %v707
      %938 = vmatpush2.msra.mxu0 %v706
      %939 = vmatprep.subr.mxu0 %v705
      %940 = vmatpush2.msra.mxu0 %v704
      %941 = vmatprep.mubr.f32.mxu0 %v381
      %942 = vmatmul.mubr.f32.gmra.mxu0 %v380
      %v943 = vpop.f32.mrf.mxu0
      %v944 = vadd.f32 %v867, %v943
      %v945 = vpop.f32.mrf.mxu0
      %v946 = vadd.f32 %v869, %v945
      %947 = vmatprep.mubr.f32.mxu0 %v383
      %948 = vmatmul.mubr.f32.gmra.mxu0 %v382
      %v949 = vpop.f32.mrf.mxu0
      %v950 = vadd.f32 %v873, %v949
      %v951 = vpop.f32.mrf.mxu0
      %v952 = vadd.f32 %v875, %v951
      %953 = vdwg.mxu0
      %v954 = vld [vmem:[%s4] sm:$0xff]
      %v955 = vld [vmem:[%s4 + $0x8] sm:$0xff]
      %vm956 = vcmask 130048
      %v958 = vsel %vm956, %v954, 0
      %v961 = vsel %vm956, %v955, 0
      %963 = vmatprep.subr.mxu0 0.0
      %964 = vmatpush1.msra.mxu0 0.0
      %965 = vmatprep.subr.mxu0 0.0
      %966 = vmatpush1.msra.mxu0 0.0
      %967 = vmatprep.subr.mxu0 0.0
      %968 = vmatpush1.msra.mxu0 0.0
      %969 = vmatprep.subr.mxu0 0.0
      %970 = vmatpush1.msra.mxu0 0.0
      %971 = vmatprep.subr.mxu0 0.0
      %972 = vmatpush1.msra.mxu0 0.0
      %973 = vmatprep.subr.mxu0 0.0
      %974 = vmatpush1.msra.mxu0 0.0
      %975 = vmatprep.subr.mxu0 0.0
      %976 = vmatpush1.msra.mxu0 0.0
      %977 = vmatprep.subr.mxu0 0.0
      %978 = vmatpush1.msra.mxu0 0.0
      %979 = vmatprep.subr.mxu0 0.0
      %980 = vmatpush1.msra.mxu0 0.0
      %981 = vmatprep.subr.mxu0 0.0
      %982 = vmatpush1.msra.mxu0 0.0
      %983 = vmatprep.subr.mxu0 0.0
      %984 = vmatpush1.msra.mxu0 0.0
      %985 = vmatprep.subr.mxu0 0.0
      %986 = vmatpush1.msra.mxu0 0.0
      %987 = vmatprep.subr.mxu0 0.0
      %988 = vmatpush1.msra.mxu0 0.0
      %989 = vmatprep.subr.mxu0 0.0
      %990 = vmatpush1.msra.mxu0 0.0
      %991 = vmatprep.subr.mxu0 %v952
      %992 = vmatpush1.msra.mxu0 %v950
      %993 = vmatprep.subr.mxu0 %v946
      %994 = vmatpush1.msra.mxu0 %v944
      %995 = vmatprep.subr.mxu0 0.0
      %996 = vmatpush2.msra.mxu0 0.0
      %997 = vmatprep.subr.mxu0 0.0
      %998 = vmatpush2.msra.mxu0 0.0
      %999 = vmatprep.subr.mxu0 0.0
      %1000 = vmatpush2.msra.mxu0 0.0
      %1001 = vmatprep.subr.mxu0 0.0
      %1002 = vmatpush2.msra.mxu0 0.0
      %1003 = vmatprep.subr.mxu0 0.0
      %1004 = vmatpush2.msra.mxu0 0.0
      %1005 = vmatprep.subr.mxu0 0.0
      %1006 = vmatpush2.msra.mxu0 0.0
      %1007 = vmatprep.subr.mxu0 0.0
      %1008 = vmatpush2.msra.mxu0 0.0
      %1009 = vmatprep.subr.mxu0 0.0
      %1010 = vmatpush2.msra.mxu0 0.0
      %1011 = vmatprep.subr.mxu0 0.0
      %1012 = vmatpush2.msra.mxu0 0.0
      %1013 = vmatprep.subr.mxu0 0.0
      %1014 = vmatpush2.msra.mxu0 0.0
      %1015 = vmatprep.subr.mxu0 0.0
      %1016 = vmatpush2.msra.mxu0 0.0
      %1017 = vmatprep.subr.mxu0 0.0
      %1018 = vmatpush2.msra.mxu0 0.0
      %1019 = vmatprep.subr.mxu0 0.0
      %1020 = vmatpush2.msra.mxu0 0.0
      %1021 = vmatprep.subr.mxu0 0.0
      %1022 = vmatpush2.msra.mxu0 0.0
      %1023 = vmatprep.subr.mxu0 0.0
      %1024 = vmatpush2.msra.mxu0 0.0
      %1025 = vmatprep.subr.mxu0 0.0
      %1026 = vmatpush2.msra.mxu0 0.0
      %1027 = vmatprep.mubr.f32.mxu0 0.0
      %1028 = vmatmul.mubr.f32.gmra.mxu0 %v958
      %v1029 = vpop.f32.mrf.mxu0
      %v1030 = vadd.f32 0.0, %v1029
      %v1031 = vpop.f32.mrf.mxu0
      %v1032 = vadd.f32 0.0, %v1031
      %1033 = vmatprep.mubr.f32.mxu0 0.0
      %1034 = vmatmul.mubr.f32.gmra.mxu0 %v961
      %v1035 = vpop.f32.mrf.mxu0
      %v1036 = vadd.f32 0.0, %v1035
      %v1037 = vpop.f32.mrf.mxu0
      %v1038 = vadd.f32 0.0, %v1037
      %1039 = vdwg.mxu0
      %v1040 = vadd.f32 %v662, %v1030
      %v1041 = vadd.f32 %v664, %v1032
      %v1042 = vadd.f32 %v668, %v1036
      %v1043 = vadd.f32 %v670, %v1038
      %s1044 = scalar_lea.vmem %s2, 1024
      %v1045 = vld [vmem:[%s1044] sm:$0xff]
      %v1046 = vld [vmem:[%s1044 + $0x8] sm:$0xff]
      %v1047 = vld [vmem:[%s1044 + $0x10] sm:$0xff]
      %v1048 = vld [vmem:[%s1044 + $0x18] sm:$0xff]
      %v1049 = vld [vmem:[%s1044 + $0x20] sm:$0xff]
      %v1050 = vld [vmem:[%s1044 + $0x28] sm:$0xff]
      %v1051 = vld [vmem:[%s1044 + $0x30] sm:$0xff]
      %v1052 = vld [vmem:[%s1044 + $0x38] sm:$0xff]
      %v1053 = vld [vmem:[%s1044 + $0x40] sm:$0xff]
      %v1054 = vld [vmem:[%s1044 + $0x48] sm:$0xff]
      %v1055 = vld [vmem:[%s1044 + $0x50] sm:$0xff]
      %v1056 = vld [vmem:[%s1044 + $0x58] sm:$0xff]
      %v1057 = vld [vmem:[%s1044 + $0x60] sm:$0xff]
      %v1058 = vld [vmem:[%s1044 + $0x68] sm:$0xff]
      %v1059 = vld [vmem:[%s1044 + $0x70] sm:$0xff]
      %v1060 = vld [vmem:[%s1044 + $0x78] sm:$0xff]
      %v1061 = vld [vmem:[%s1044 + $0x80] sm:$0xff]
      %v1062 = vld [vmem:[%s1044 + $0x88] sm:$0xff]
      %v1063 = vld [vmem:[%s1044 + $0x90] sm:$0xff]
      %v1064 = vld [vmem:[%s1044 + $0x98] sm:$0xff]
      %v1065 = vld [vmem:[%s1044 + $0xa0] sm:$0xff]
      %v1066 = vld [vmem:[%s1044 + $0xa8] sm:$0xff]
      %v1067 = vld [vmem:[%s1044 + $0xb0] sm:$0xff]
      %v1068 = vld [vmem:[%s1044 + $0xb8] sm:$0xff]
      %v1069 = vld [vmem:[%s1044 + $0xc0] sm:$0xff]
      %v1070 = vld [vmem:[%s1044 + $0xc8] sm:$0xff]
      %v1071 = vld [vmem:[%s1044 + $0xd0] sm:$0xff]
      %v1072 = vld [vmem:[%s1044 + $0xd8] sm:$0xff]
      %v1073 = vld [vmem:[%s1044 + $0xe0] sm:$0xff]
      %v1074 = vld [vmem:[%s1044 + $0xe8] sm:$0xff]
      %v1075 = vld [vmem:[%s1044 + $0xf0] sm:$0xff]
      %v1076 = vld [vmem:[%s1044 + $0xf8] sm:$0xff]
      %v1077 = vld [vmem:[%s1044 + $0x100] sm:$0xff]
      %v1078 = vld [vmem:[%s1044 + $0x108] sm:$0xff]
      %v1079 = vld [vmem:[%s1044 + $0x110] sm:$0xff]
      %v1080 = vld [vmem:[%s1044 + $0x118] sm:$0xff]
      %v1081 = vld [vmem:[%s1044 + $0x120] sm:$0xff]
      %v1082 = vld [vmem:[%s1044 + $0x128] sm:$0xff]
      %v1083 = vld [vmem:[%s1044 + $0x130] sm:$0xff]
      %v1084 = vld [vmem:[%s1044 + $0x138] sm:$0xff]
      %v1085 = vld [vmem:[%s1044 + $0x140] sm:$0xff]
      %v1086 = vld [vmem:[%s1044 + $0x148] sm:$0xff]
      %v1087 = vld [vmem:[%s1044 + $0x150] sm:$0xff]
      %v1088 = vld [vmem:[%s1044 + $0x158] sm:$0xff]
      %v1089 = vld [vmem:[%s1044 + $0x160] sm:$0xff]
      %v1090 = vld [vmem:[%s1044 + $0x168] sm:$0xff]
      %v1091 = vld [vmem:[%s1044 + $0x170] sm:$0xff]
      %v1092 = vld [vmem:[%s1044 + $0x178] sm:$0xff]
      %v1093 = vld [vmem:[%s1044 + $0x180] sm:$0xff]
      %v1094 = vld [vmem:[%s1044 + $0x188] sm:$0xff]
      %v1095 = vld [vmem:[%s1044 + $0x190] sm:$0xff]
      %v1096 = vld [vmem:[%s1044 + $0x198] sm:$0xff]
      %v1097 = vld [vmem:[%s1044 + $0x1a0] sm:$0xff]
      %v1098 = vld [vmem:[%s1044 + $0x1a8] sm:$0xff]
      %v1099 = vld [vmem:[%s1044 + $0x1b0] sm:$0xff]
      %v1100 = vld [vmem:[%s1044 + $0x1b8] sm:$0xff]
      %v1101 = vld [vmem:[%s1044 + $0x1c0] sm:$0xff]
      %v1102 = vld [vmem:[%s1044 + $0x1c8] sm:$0xff]
      %v1103 = vld [vmem:[%s1044 + $0x1d0] sm:$0xff]
      %v1104 = vld [vmem:[%s1044 + $0x1d8] sm:$0xff]
      %v1105 = vld [vmem:[%s1044 + $0x1e0] sm:$0xff]
      %v1106 = vld [vmem:[%s1044 + $0x1e8] sm:$0xff]
      %v1107 = vld [vmem:[%s1044 + $0x1f0] sm:$0xff]
      %v1108 = vld [vmem:[%s1044 + $0x1f8] sm:$0xff]
      %s1109 = scalar_lea.vmem %s3, 1024
      %v1110 = vld [vmem:[%s1109] sm:$0xff]
      %v1111 = vld [vmem:[%s1109 + $0x8] sm:$0xff]
      %v1112 = vld [vmem:[%s1109 + $0x10] sm:$0xff]
      %v1113 = vld [vmem:[%s1109 + $0x18] sm:$0xff]
      %v1114 = vld [vmem:[%s1109 + $0x20] sm:$0xff]
      %v1115 = vld [vmem:[%s1109 + $0x28] sm:$0xff]
      %v1116 = vld [vmem:[%s1109 + $0x30] sm:$0xff]
      %v1117 = vld [vmem:[%s1109 + $0x38] sm:$0xff]
      %v1118 = vld [vmem:[%s1109 + $0x40] sm:$0xff]
      %v1119 = vld [vmem:[%s1109 + $0x48] sm:$0xff]
      %v1120 = vld [vmem:[%s1109 + $0x50] sm:$0xff]
      %v1121 = vld [vmem:[%s1109 + $0x58] sm:$0xff]
      %v1122 = vld [vmem:[%s1109 + $0x60] sm:$0xff]
      %v1123 = vld [vmem:[%s1109 + $0x68] sm:$0xff]
      %v1124 = vld [vmem:[%s1109 + $0x70] sm:$0xff]
      %v1125 = vld [vmem:[%s1109 + $0x78] sm:$0xff]
      %v1126 = vld [vmem:[%s1109 + $0x80] sm:$0xff]
      %v1127 = vld [vmem:[%s1109 + $0x88] sm:$0xff]
      %v1128 = vld [vmem:[%s1109 + $0x90] sm:$0xff]
      %v1129 = vld [vmem:[%s1109 + $0x98] sm:$0xff]
      %v1130 = vld [vmem:[%s1109 + $0xa0] sm:$0xff]
      %v1131 = vld [vmem:[%s1109 + $0xa8] sm:$0xff]
      %v1132 = vld [vmem:[%s1109 + $0xb0] sm:$0xff]
      %v1133 = vld [vmem:[%s1109 + $0xb8] sm:$0xff]
      %v1134 = vld [vmem:[%s1109 + $0xc0] sm:$0xff]
      %v1135 = vld [vmem:[%s1109 + $0xc8] sm:$0xff]
      %v1136 = vld [vmem:[%s1109 + $0xd0] sm:$0xff]
      %v1137 = vld [vmem:[%s1109 + $0xd8] sm:$0xff]
      %v1138 = vld [vmem:[%s1109 + $0xe0] sm:$0xff]
      %v1139 = vld [vmem:[%s1109 + $0xe8] sm:$0xff]
      %v1140 = vld [vmem:[%s1109 + $0xf0] sm:$0xff]
      %v1141 = vld [vmem:[%s1109 + $0xf8] sm:$0xff]
      %v1142 = vld [vmem:[%s1109 + $0x100] sm:$0xff]
      %v1143 = vld [vmem:[%s1109 + $0x108] sm:$0xff]
      %v1144 = vld [vmem:[%s1109 + $0x110] sm:$0xff]
      %v1145 = vld [vmem:[%s1109 + $0x118] sm:$0xff]
      %v1146 = vld [vmem:[%s1109 + $0x120] sm:$0xff]
      %v1147 = vld [vmem:[%s1109 + $0x128] sm:$0xff]
      %v1148 = vld [vmem:[%s1109 + $0x130] sm:$0xff]
      %v1149 = vld [vmem:[%s1109 + $0x138] sm:$0xff]
      %v1150 = vld [vmem:[%s1109 + $0x140] sm:$0xff]
      %v1151 = vld [vmem:[%s1109 + $0x148] sm:$0xff]
      %v1152 = vld [vmem:[%s1109 + $0x150] sm:$0xff]
      %v1153 = vld [vmem:[%s1109 + $0x158] sm:$0xff]
      %v1154 = vld [vmem:[%s1109 + $0x160] sm:$0xff]
      %v1155 = vld [vmem:[%s1109 + $0x168] sm:$0xff]
      %v1156 = vld [vmem:[%s1109 + $0x170] sm:$0xff]
      %v1157 = vld [vmem:[%s1109 + $0x178] sm:$0xff]
      %v1158 = vld [vmem:[%s1109 + $0x180] sm:$0xff]
      %v1159 = vld [vmem:[%s1109 + $0x188] sm:$0xff]
      %v1160 = vld [vmem:[%s1109 + $0x190] sm:$0xff]
      %v1161 = vld [vmem:[%s1109 + $0x198] sm:$0xff]
      %v1162 = vld [vmem:[%s1109 + $0x1a0] sm:$0xff]
      %v1163 = vld [vmem:[%s1109 + $0x1a8] sm:$0xff]
      %v1164 = vld [vmem:[%s1109 + $0x1b0] sm:$0xff]
      %v1165 = vld [vmem:[%s1109 + $0x1b8] sm:$0xff]
      %v1166 = vld [vmem:[%s1109 + $0x1c0] sm:$0xff]
      %v1167 = vld [vmem:[%s1109 + $0x1c8] sm:$0xff]
      %v1168 = vld [vmem:[%s1109 + $0x1d0] sm:$0xff]
      %v1169 = vld [vmem:[%s1109 + $0x1d8] sm:$0xff]
      %v1170 = vld [vmem:[%s1109 + $0x1e0] sm:$0xff]
      %v1171 = vld [vmem:[%s1109 + $0x1e8] sm:$0xff]
      %v1172 = vld [vmem:[%s1109 + $0x1f0] sm:$0xff]
      %v1173 = vld [vmem:[%s1109 + $0x1f8] sm:$0xff]
      %1174 = vmatprep.subr.mxu0 %v1141
      %1175 = vmatpush1.msra.mxu0 %v1140
      %1176 = vmatprep.subr.mxu0 %v1139
      %1177 = vmatpush1.msra.mxu0 %v1138
      %1178 = vmatprep.subr.mxu0 %v1137
      %1179 = vmatpush1.msra.mxu0 %v1136
      %1180 = vmatprep.subr.mxu0 %v1135
      %1181 = vmatpush1.msra.mxu0 %v1134
      %1182 = vmatprep.subr.mxu0 %v1133
      %1183 = vmatpush1.msra.mxu0 %v1132
      %1184 = vmatprep.subr.mxu0 %v1131
      %1185 = vmatpush1.msra.mxu0 %v1130
      %1186 = vmatprep.subr.mxu0 %v1129
      %1187 = vmatpush1.msra.mxu0 %v1128
      %1188 = vmatprep.subr.mxu0 %v1127
      %1189 = vmatpush1.msra.mxu0 %v1126
      %1190 = vmatprep.subr.mxu0 %v1125
      %1191 = vmatpush1.msra.mxu0 %v1124
      %1192 = vmatprep.subr.mxu0 %v1123
      %1193 = vmatpush1.msra.mxu0 %v1122
      %1194 = vmatprep.subr.mxu0 %v1121
      %1195 = vmatpush1.msra.mxu0 %v1120
      %1196 = vmatprep.subr.mxu0 %v1119
      %1197 = vmatpush1.msra.mxu0 %v1118
      %1198 = vmatprep.subr.mxu0 %v1117
      %1199 = vmatpush1.msra.mxu0 %v1116
      %1200 = vmatprep.subr.mxu0 %v1115
      %1201 = vmatpush1.msra.mxu0 %v1114
      %1202 = vmatprep.subr.mxu0 %v1113
      %1203 = vmatpush1.msra.mxu0 %v1112
      %1204 = vmatprep.subr.mxu0 %v1111
      %1205 = vmatpush1.msra.mxu0 %v1110
      %1206 = vmatprep.subr.mxu0 %v1173
      %1207 = vmatpush2.msra.mxu0 %v1172
      %1208 = vmatprep.subr.mxu0 %v1171
      %1209 = vmatpush2.msra.mxu0 %v1170
      %1210 = vmatprep.subr.mxu0 %v1169
      %1211 = vmatpush2.msra.mxu0 %v1168
      %1212 = vmatprep.subr.mxu0 %v1167
      %1213 = vmatpush2.msra.mxu0 %v1166
      %1214 = vmatprep.subr.mxu0 %v1165
      %1215 = vmatpush2.msra.mxu0 %v1164
      %1216 = vmatprep.subr.mxu0 %v1163
      %1217 = vmatpush2.msra.mxu0 %v1162
      %1218 = vmatprep.subr.mxu0 %v1161
      %1219 = vmatpush2.msra.mxu0 %v1160
      %1220 = vmatprep.subr.mxu0 %v1159
      %1221 = vmatpush2.msra.mxu0 %v1158
      %1222 = vmatprep.subr.mxu0 %v1157
      %1223 = vmatpush2.msra.mxu0 %v1156
      %1224 = vmatprep.subr.mxu0 %v1155
      %1225 = vmatpush2.msra.mxu0 %v1154
      %1226 = vmatprep.subr.mxu0 %v1153
      %1227 = vmatpush2.msra.mxu0 %v1152
      %1228 = vmatprep.subr.mxu0 %v1151
      %1229 = vmatpush2.msra.mxu0 %v1150
      %1230 = vmatprep.subr.mxu0 %v1149
      %1231 = vmatpush2.msra.mxu0 %v1148
      %1232 = vmatprep.subr.mxu0 %v1147
      %1233 = vmatpush2.msra.mxu0 %v1146
      %1234 = vmatprep.subr.mxu0 %v1145
      %1235 = vmatpush2.msra.mxu0 %v1144
      %1236 = vmatprep.subr.mxu0 %v1143
      %1237 = vmatpush2.msra.mxu0 %v1142
      %1238 = vmatprep.mubr.f32.mxu0 %v385
      %1239 = vmatmul.mubr.f32.gmra.mxu0 %v384
      %v1240 = vpop.f32.mrf.mxu0
      %v1241 = vadd.f32 0.0, %v1240
      %v1242 = vpop.f32.mrf.mxu0
      %v1243 = vadd.f32 0.0, %v1242
      %1244 = vmatprep.mubr.f32.mxu0 %v387
      %1245 = vmatmul.mubr.f32.gmra.mxu0 %v386
      %v1246 = vpop.f32.mrf.mxu0
      %v1247 = vadd.f32 0.0, %v1246
      %v1248 = vpop.f32.mrf.mxu0
      %v1249 = vadd.f32 0.0, %v1248
      %1250 = vdwg.mxu0
      %1251 = vmatprep.subr.mxu0 %v1076
      %1252 = vmatpush1.msra.mxu0 %v1075
      %1253 = vmatprep.subr.mxu0 %v1074
      %1254 = vmatpush1.msra.mxu0 %v1073
      %1255 = vmatprep.subr.mxu0 %v1072
      %1256 = vmatpush1.msra.mxu0 %v1071
      %1257 = vmatprep.subr.mxu0 %v1070
      %1258 = vmatpush1.msra.mxu0 %v1069
      %1259 = vmatprep.subr.mxu0 %v1068
      %1260 = vmatpush1.msra.mxu0 %v1067
      %1261 = vmatprep.subr.mxu0 %v1066
      %1262 = vmatpush1.msra.mxu0 %v1065
      %1263 = vmatprep.subr.mxu0 %v1064
      %1264 = vmatpush1.msra.mxu0 %v1063
      %1265 = vmatprep.subr.mxu0 %v1062
      %1266 = vmatpush1.msra.mxu0 %v1061
      %1267 = vmatprep.subr.mxu0 %v1060
      %1268 = vmatpush1.msra.mxu0 %v1059
      %1269 = vmatprep.subr.mxu0 %v1058
      %1270 = vmatpush1.msra.mxu0 %v1057
      %1271 = vmatprep.subr.mxu0 %v1056
      %1272 = vmatpush1.msra.mxu0 %v1055
      %1273 = vmatprep.subr.mxu0 %v1054
      %1274 = vmatpush1.msra.mxu0 %v1053
      %1275 = vmatprep.subr.mxu0 %v1052
      %1276 = vmatpush1.msra.mxu0 %v1051
      %1277 = vmatprep.subr.mxu0 %v1050
      %1278 = vmatpush1.msra.mxu0 %v1049
      %1279 = vmatprep.subr.mxu0 %v1048
      %1280 = vmatpush1.msra.mxu0 %v1047
      %1281 = vmatprep.subr.mxu0 %v1046
      %1282 = vmatpush1.msra.mxu0 %v1045
      %1283 = vmatprep.subr.mxu0 %v1108
      %1284 = vmatpush2.msra.mxu0 %v1107
      %1285 = vmatprep.subr.mxu0 %v1106
      %1286 = vmatpush2.msra.mxu0 %v1105
      %1287 = vmatprep.subr.mxu0 %v1104
      %1288 = vmatpush2.msra.mxu0 %v1103
      %1289 = vmatprep.subr.mxu0 %v1102
      %1290 = vmatpush2.msra.mxu0 %v1101
      %1291 = vmatprep.subr.mxu0 %v1100
      %1292 = vmatpush2.msra.mxu0 %v1099
      %1293 = vmatprep.subr.mxu0 %v1098
      %1294 = vmatpush2.msra.mxu0 %v1097
      %1295 = vmatprep.subr.mxu0 %v1096
      %1296 = vmatpush2.msra.mxu0 %v1095
      %1297 = vmatprep.subr.mxu0 %v1094
      %1298 = vmatpush2.msra.mxu0 %v1093
      %1299 = vmatprep.subr.mxu0 %v1092
      %1300 = vmatpush2.msra.mxu0 %v1091
      %1301 = vmatprep.subr.mxu0 %v1090
      %1302 = vmatpush2.msra.mxu0 %v1089
      %1303 = vmatprep.subr.mxu0 %v1088
      %1304 = vmatpush2.msra.mxu0 %v1087
      %1305 = vmatprep.subr.mxu0 %v1086
      %1306 = vmatpush2.msra.mxu0 %v1085
      %1307 = vmatprep.subr.mxu0 %v1084
      %1308 = vmatpush2.msra.mxu0 %v1083
      %1309 = vmatprep.subr.mxu0 %v1082
      %1310 = vmatpush2.msra.mxu0 %v1081
      %1311 = vmatprep.subr.mxu0 %v1080
      %1312 = vmatpush2.msra.mxu0 %v1079
      %1313 = vmatprep.subr.mxu0 %v1078
      %1314 = vmatpush2.msra.mxu0 %v1077
      %1315 = vmatprep.mubr.f32.mxu0 %v381
      %1316 = vmatmul.mubr.f32.gmra.mxu0 %v380
      %v1317 = vpop.f32.mrf.mxu0
      %v1318 = vadd.f32 %v1241, %v1317
      %v1319 = vpop.f32.mrf.mxu0
      %v1320 = vadd.f32 %v1243, %v1319
      %1321 = vmatprep.mubr.f32.mxu0 %v383
      %1322 = vmatmul.mubr.f32.gmra.mxu0 %v382
      %v1323 = vpop.f32.mrf.mxu0
      %v1324 = vadd.f32 %v1247, %v1323
      %v1325 = vpop.f32.mrf.mxu0
      %v1326 = vadd.f32 %v1249, %v1325
      %1327 = vdwg.mxu0
      %s1328 = scalar_lea.vmem %s4, 32
      %v1329 = vld [vmem:[%s1328] sm:$0xff]
      %v1330 = vld [vmem:[%s1328 + $0x8] sm:$0xff]
      %v1332 = vsel %vm956, %v1329, 0
      %v1335 = vsel %vm956, %v1330, 0
      %1337 = vmatprep.subr.mxu0 0.0
      %1338 = vmatpush1.msra.mxu0 0.0
      %1339 = vmatprep.subr.mxu0 0.0
      %1340 = vmatpush1.msra.mxu0 0.0
      %1341 = vmatprep.subr.mxu0 0.0
      %1342 = vmatpush1.msra.mxu0 0.0
      %1343 = vmatprep.subr.mxu0 0.0
      %1344 = vmatpush1.msra.mxu0 0.0
      %1345 = vmatprep.subr.mxu0 0.0
      %1346 = vmatpush1.msra.mxu0 0.0
      %1347 = vmatprep.subr.mxu0 0.0
      %1348 = vmatpush1.msra.mxu0 0.0
      %1349 = vmatprep.subr.mxu0 0.0
      %1350 = vmatpush1.msra.mxu0 0.0
      %1351 = vmatprep.subr.mxu0 0.0
      %1352 = vmatpush1.msra.mxu0 0.0
      %1353 = vmatprep.subr.mxu0 0.0
      %1354 = vmatpush1.msra.mxu0 0.0
      %1355 = vmatprep.subr.mxu0 0.0
      %1356 = vmatpush1.msra.mxu0 0.0
      %1357 = vmatprep.subr.mxu0 0.0
      %1358 = vmatpush1.msra.mxu0 0.0
      %1359 = vmatprep.subr.mxu0 0.0
      %1360 = vmatpush1.msra.mxu0 0.0
      %1361 = vmatprep.subr.mxu0 0.0
      %1362 = vmatpush1.msra.mxu0 0.0
      %1363 = vmatprep.subr.mxu0 0.0
      %1364 = vmatpush1.msra.mxu0 0.0
      %1365 = vmatprep.subr.mxu0 %v1326
      %1366 = vmatpush1.msra.mxu0 %v1324
      %1367 = vmatprep.subr.mxu0 %v1320
      %1368 = vmatpush1.msra.mxu0 %v1318
      %1369 = vmatprep.subr.mxu0 0.0
      %1370 = vmatpush2.msra.mxu0 0.0
      %1371 = vmatprep.subr.mxu0 0.0
      %1372 = vmatpush2.msra.mxu0 0.0
      %1373 = vmatprep.subr.mxu0 0.0
      %1374 = vmatpush2.msra.mxu0 0.0
      %1375 = vmatprep.subr.mxu0 0.0
      %1376 = vmatpush2.msra.mxu0 0.0
      %1377 = vmatprep.subr.mxu0 0.0
      %1378 = vmatpush2.msra.mxu0 0.0
      %1379 = vmatprep.subr.mxu0 0.0
      %1380 = vmatpush2.msra.mxu0 0.0
      %1381 = vmatprep.subr.mxu0 0.0
      %1382 = vmatpush2.msra.mxu0 0.0
      %1383 = vmatprep.subr.mxu0 0.0
      %1384 = vmatpush2.msra.mxu0 0.0
      %1385 = vmatprep.subr.mxu0 0.0
      %1386 = vmatpush2.msra.mxu0 0.0
      %1387 = vmatprep.subr.mxu0 0.0
      %1388 = vmatpush2.msra.mxu0 0.0
      %1389 = vmatprep.subr.mxu0 0.0
      %1390 = vmatpush2.msra.mxu0 0.0
      %1391 = vmatprep.subr.mxu0 0.0
      %1392 = vmatpush2.msra.mxu0 0.0
      %1393 = vmatprep.subr.mxu0 0.0
      %1394 = vmatpush2.msra.mxu0 0.0
      %1395 = vmatprep.subr.mxu0 0.0
      %1396 = vmatpush2.msra.mxu0 0.0
      %1397 = vmatprep.subr.mxu0 0.0
      %1398 = vmatpush2.msra.mxu0 0.0
      %1399 = vmatprep.subr.mxu0 0.0
      %1400 = vmatpush2.msra.mxu0 0.0
      %1401 = vmatprep.mubr.f32.mxu0 0.0
      %1402 = vmatmul.mubr.f32.gmra.mxu0 %v1332
      %v1403 = vpop.f32.mrf.mxu0
      %v1404 = vadd.f32 0.0, %v1403
      %v1405 = vpop.f32.mrf.mxu0
      %v1406 = vadd.f32 0.0, %v1405
      %1407 = vmatprep.mubr.f32.mxu0 0.0
      %1408 = vmatmul.mubr.f32.gmra.mxu0 %v1335
      %v1409 = vpop.f32.mrf.mxu0
      %v1410 = vadd.f32 0.0, %v1409
      %v1411 = vpop.f32.mrf.mxu0
      %v1412 = vadd.f32 0.0, %v1411
      %1413 = vdwg.mxu0
      %v1414 = vadd.f32 %v1040, %v1404
      %v1415 = vadd.f32 %v1041, %v1406
      %v1416 = vadd.f32 %v1042, %v1410
      %v1417 = vadd.f32 %v1043, %v1412
      %v1418 = vld [vmem:[%s5] sm:$0x3]
      %v1420 = vlaneseq
      %v1421 = vshrl.u32 %v1420, 7
      %v1422 = vsub.s32 0, %v1421
      %v1423 = vrot.slane %v1418, %v1422
      %v1424 = vlaneseq
      %v1425 = vshrl.u32 %v1424, 7
      %v1426 = vsub.s32 1, %v1425
      %v1427 = vrot.slane %v1418, %v1426
      %v1430 = vadd.f32 %v1414, %v1423
      %v1431 = vadd.f32 %v1415, %v1427
      %v1432 = vadd.f32 %v1416, %v1423
      %v1433 = vadd.f32 %v1417, %v1427
      %v1434 = vadd.f32 %v1430, %v1432
      %v1435 = vrot.slane %v1434, 4
      %v1436 = vadd.f32 %v1434, %v1435
      %v1437 = vrot.slane %v1436, 2
      %v1438 = vadd.f32 %v1436, %v1437
      %v1439 = vrot.slane %v1438, 1
      %v1440 = vadd.f32 %v1438, %v1439
      %v1441 = vadd.f32 %v1431, %v1433
      %v1442 = vrot.slane %v1441, 4
      %v1443 = vadd.f32 %v1441, %v1442
      %v1444 = vrot.slane %v1443, 2
      %v1445 = vadd.f32 %v1443, %v1444
      %v1446 = vrot.slane %v1445, 1
      %v1447 = vadd.f32 %v1445, %v1446
      %v1448 = vld [vmem:[%s6] sm:$0xff]
      %v1449 = vld [vmem:[%s6 + $0x8] sm:$0xff]
      %v1450 = vld [vmem:[%s6 + $0x10] sm:$0xff]
      %v1451 = vld [vmem:[%s6 + $0x18] sm:$0xff]
      %v1452 = vld [vmem:[%s6 + $0x20] sm:$0xff]
      %v1453 = vld [vmem:[%s6 + $0x28] sm:$0xff]
      %v1454 = vld [vmem:[%s6 + $0x30] sm:$0xff]
      %v1455 = vld [vmem:[%s6 + $0x38] sm:$0xff]
      %v1456 = vld [vmem:[%s6 + $0x40] sm:$0xff]
      %v1457 = vld [vmem:[%s6 + $0x48] sm:$0xff]
      %v1458 = vld [vmem:[%s6 + $0x50] sm:$0xff]
      %v1459 = vld [vmem:[%s6 + $0x58] sm:$0xff]
      %v1460 = vld [vmem:[%s6 + $0x60] sm:$0xff]
      %v1461 = vld [vmem:[%s6 + $0x68] sm:$0xff]
      %v1462 = vld [vmem:[%s6 + $0x70] sm:$0xff]
      %v1463 = vld [vmem:[%s6 + $0x78] sm:$0xff]
      %v1464 = vld [vmem:[%s6 + $0x80] sm:$0xff]
      %v1465 = vld [vmem:[%s6 + $0x88] sm:$0xff]
      %v1466 = vld [vmem:[%s6 + $0x90] sm:$0xff]
      %v1467 = vld [vmem:[%s6 + $0x98] sm:$0xff]
      %v1468 = vld [vmem:[%s6 + $0xa0] sm:$0xff]
      %v1469 = vld [vmem:[%s6 + $0xa8] sm:$0xff]
      %v1470 = vld [vmem:[%s6 + $0xb0] sm:$0xff]
      %v1471 = vld [vmem:[%s6 + $0xb8] sm:$0xff]
      %v1472 = vld [vmem:[%s6 + $0xc0] sm:$0xff]
      %v1473 = vld [vmem:[%s6 + $0xc8] sm:$0xff]
      %v1474 = vld [vmem:[%s6 + $0xd0] sm:$0xff]
      %v1475 = vld [vmem:[%s6 + $0xd8] sm:$0xff]
      %v1476 = vld [vmem:[%s6 + $0xe0] sm:$0xff]
      %v1477 = vld [vmem:[%s6 + $0xe8] sm:$0xff]
      %v1478 = vld [vmem:[%s6 + $0xf0] sm:$0xff]
      %v1479 = vld [vmem:[%s6 + $0xf8] sm:$0xff]
      %1480 = vmatprep.subr.mxu0 0.0
      %1481 = vmatpush1.msra.mxu0 %v1463
      %1482 = vmatprep.subr.mxu0 0.0
      %1483 = vmatpush1.msra.mxu0 %v1462
      %1484 = vmatprep.subr.mxu0 0.0
      %1485 = vmatpush1.msra.mxu0 %v1461
      %1486 = vmatprep.subr.mxu0 0.0
      %1487 = vmatpush1.msra.mxu0 %v1460
      %1488 = vmatprep.subr.mxu0 0.0
      %1489 = vmatpush1.msra.mxu0 %v1459
      %1490 = vmatprep.subr.mxu0 0.0
      %1491 = vmatpush1.msra.mxu0 %v1458
      %1492 = vmatprep.subr.mxu0 0.0
      %1493 = vmatpush1.msra.mxu0 %v1457
      %1494 = vmatprep.subr.mxu0 0.0
      %1495 = vmatpush1.msra.mxu0 %v1456
      %1496 = vmatprep.subr.mxu0 0.0
      %1497 = vmatpush1.msra.mxu0 %v1455
      %1498 = vmatprep.subr.mxu0 0.0
      %1499 = vmatpush1.msra.mxu0 %v1454
      %1500 = vmatprep.subr.mxu0 0.0
      %1501 = vmatpush1.msra.mxu0 %v1453
      %1502 = vmatprep.subr.mxu0 0.0
      %1503 = vmatpush1.msra.mxu0 %v1452
      %1504 = vmatprep.subr.mxu0 0.0
      %1505 = vmatpush1.msra.mxu0 %v1451
      %1506 = vmatprep.subr.mxu0 0.0
      %1507 = vmatpush1.msra.mxu0 %v1450
      %1508 = vmatprep.subr.mxu0 0.0
      %1509 = vmatpush1.msra.mxu0 %v1449
      %1510 = vmatprep.subr.mxu0 0.0
      %1511 = vmatpush1.msra.mxu0 %v1448
      %1512 = vmatprep.subr.mxu0 0.0
      %1513 = vmatpush2.msra.mxu0 %v1479
      %1514 = vmatprep.subr.mxu0 0.0
      %1515 = vmatpush2.msra.mxu0 %v1478
      %1516 = vmatprep.subr.mxu0 0.0
      %1517 = vmatpush2.msra.mxu0 %v1477
      %1518 = vmatprep.subr.mxu0 0.0
      %1519 = vmatpush2.msra.mxu0 %v1476
      %1520 = vmatprep.subr.mxu0 0.0
      %1521 = vmatpush2.msra.mxu0 %v1475
      %1522 = vmatprep.subr.mxu0 0.0
      %1523 = vmatpush2.msra.mxu0 %v1474
      %1524 = vmatprep.subr.mxu0 0.0
      %1525 = vmatpush2.msra.mxu0 %v1473
      %1526 = vmatprep.subr.mxu0 0.0
      %1527 = vmatpush2.msra.mxu0 %v1472
      %1528 = vmatprep.subr.mxu0 0.0
      %1529 = vmatpush2.msra.mxu0 %v1471
      %1530 = vmatprep.subr.mxu0 0.0
      %1531 = vmatpush2.msra.mxu0 %v1470
      %1532 = vmatprep.subr.mxu0 0.0
      %1533 = vmatpush2.msra.mxu0 %v1469
      %1534 = vmatprep.subr.mxu0 0.0
      %1535 = vmatpush2.msra.mxu0 %v1468
      %1536 = vmatprep.subr.mxu0 0.0
      %1537 = vmatpush2.msra.mxu0 %v1467
      %1538 = vmatprep.subr.mxu0 0.0
      %1539 = vmatpush2.msra.mxu0 %v1466
      %1540 = vmatprep.subr.mxu0 0.0
      %1541 = vmatpush2.msra.mxu0 %v1465
      %1542 = vmatprep.subr.mxu0 0.0
      %1543 = vmatpush2.msra.mxu0 %v1464
      %1544 = vmatprep.mubr.f32.mxu0 %v1447
      %1545 = vmatmul.mubr.f32.gmra.mxu0 %v1440
      %v1546 = vpop.f32.mrf.mxu0
      %v1547 = vadd.f32 0.0, %v1546
      %v1548 = vpop.f32.mrf.mxu0
      %1549 = vdwg.mxu0
      %v1550 = vmul.f32 %v1547, 0.00390625
      %v1551 = vld [vmem:[%s8] sm:$0xff]
      %v1552 = vld [vmem:[%s8 + $0x8] sm:$0xff]
      %v1554 = vsel %vm956, %v1550, 0
      %1556 = vmatprep.subr.mxu0 0.0
      %1557 = vmatpush1.msra.mxu0 0.0
      %1558 = vmatprep.subr.mxu0 0.0
      %1559 = vmatpush1.msra.mxu0 0.0
      %1560 = vmatprep.subr.mxu0 0.0
      %1561 = vmatpush1.msra.mxu0 0.0
      %1562 = vmatprep.subr.mxu0 0.0
      %1563 = vmatpush1.msra.mxu0 0.0
      %1564 = vmatprep.subr.mxu0 0.0
      %1565 = vmatpush1.msra.mxu0 0.0
      %1566 = vmatprep.subr.mxu0 0.0
      %1567 = vmatpush1.msra.mxu0 0.0
      %1568 = vmatprep.subr.mxu0 0.0
      %1569 = vmatpush1.msra.mxu0 0.0
      %1570 = vmatprep.subr.mxu0 0.0
      %1571 = vmatpush1.msra.mxu0 0.0
      %1572 = vmatprep.subr.mxu0 0.0
      %1573 = vmatpush1.msra.mxu0 0.0
      %1574 = vmatprep.subr.mxu0 0.0
      %1575 = vmatpush1.msra.mxu0 0.0
      %1576 = vmatprep.subr.mxu0 0.0
      %1577 = vmatpush1.msra.mxu0 0.0
      %1578 = vmatprep.subr.mxu0 0.0
      %1579 = vmatpush1.msra.mxu0 0.0
      %1580 = vmatprep.subr.mxu0 0.0
      %1581 = vmatpush1.msra.mxu0 0.0
      %1582 = vmatprep.subr.mxu0 0.0
      %1583 = vmatpush1.msra.mxu0 0.0
      %1584 = vmatprep.subr.mxu0 0.0
      %1585 = vmatpush1.msra.mxu0 %v1552
      %1586 = vmatprep.subr.mxu0 0.0
      %1587 = vmatpush1.msra.mxu0 %v1551
      %1588 = vmatprep.subr.mxu0 0.0
      %1589 = vmatpush2.msra.mxu0 0.0
      %1590 = vmatprep.subr.mxu0 0.0
      %1591 = vmatpush2.msra.mxu0 0.0
      %1592 = vmatprep.subr.mxu0 0.0
      %1593 = vmatpush2.msra.mxu0 0.0
      %1594 = vmatprep.subr.mxu0 0.0
      %1595 = vmatpush2.msra.mxu0 0.0
      %1596 = vmatprep.subr.mxu0 0.0
      %1597 = vmatpush2.msra.mxu0 0.0
      %1598 = vmatprep.subr.mxu0 0.0
      %1599 = vmatpush2.msra.mxu0 0.0
      %1600 = vmatprep.subr.mxu0 0.0
      %1601 = vmatpush2.msra.mxu0 0.0
      %1602 = vmatprep.subr.mxu0 0.0
      %1603 = vmatpush2.msra.mxu0 0.0
      %1604 = vmatprep.subr.mxu0 0.0
      %1605 = vmatpush2.msra.mxu0 0.0
      %1606 = vmatprep.subr.mxu0 0.0
      %1607 = vmatpush2.msra.mxu0 0.0
      %1608 = vmatprep.subr.mxu0 0.0
      %1609 = vmatpush2.msra.mxu0 0.0
      %1610 = vmatprep.subr.mxu0 0.0
      %1611 = vmatpush2.msra.mxu0 0.0
      %1612 = vmatprep.subr.mxu0 0.0
      %1613 = vmatpush2.msra.mxu0 0.0
      %1614 = vmatprep.subr.mxu0 0.0
      %1615 = vmatpush2.msra.mxu0 0.0
      %1616 = vmatprep.subr.mxu0 0.0
      %1617 = vmatpush2.msra.mxu0 0.0
      %1618 = vmatprep.subr.mxu0 0.0
      %1619 = vmatpush2.msra.mxu0 0.0
      %1620 = vmatprep.mubr.f32.mxu0 0.0
      %1621 = vmatmul.mubr.f32.gmra.mxu0 %v1554
      %v1622 = vpop.f32.mrf.mxu0
      %v1623 = vadd.f32 0.0, %v1622
      %v1624 = vpop.f32.mrf.mxu0
      %1625 = vdwg.mxu0
      %v1626 = vmax.f32 %v1623, 0.0
      %v1627 = vld [vmem:[%s9] sm:$0xf]
      %vm1628 = vcmask 31744
      %v1630 = vsel %vm1628, %v1626, 0
      %vm1632 = vcmask 1043456
      %v1634 = vsel %vm1632, %v1627, 0
      %1636 = vmatprep.subr.mxu0 0.0
      %1637 = vmatpush1.msra.mxu0 0.0
      %1638 = vmatprep.subr.mxu0 0.0
      %1639 = vmatpush1.msra.mxu0 0.0
      %1640 = vmatprep.subr.mxu0 0.0
      %1641 = vmatpush1.msra.mxu0 0.0
      %1642 = vmatprep.subr.mxu0 0.0
      %1643 = vmatpush1.msra.mxu0 0.0
      %1644 = vmatprep.subr.mxu0 0.0
      %1645 = vmatpush1.msra.mxu0 0.0
      %1646 = vmatprep.subr.mxu0 0.0
      %1647 = vmatpush1.msra.mxu0 0.0
      %1648 = vmatprep.subr.mxu0 0.0
      %1649 = vmatpush1.msra.mxu0 0.0
      %1650 = vmatprep.subr.mxu0 0.0
      %1651 = vmatpush1.msra.mxu0 0.0
      %1652 = vmatprep.subr.mxu0 0.0
      %1653 = vmatpush1.msra.mxu0 0.0
      %1654 = vmatprep.subr.mxu0 0.0
      %1655 = vmatpush1.msra.mxu0 0.0
      %1656 = vmatprep.subr.mxu0 0.0
      %1657 = vmatpush1.msra.mxu0 0.0
      %1658 = vmatprep.subr.mxu0 0.0
      %1659 = vmatpush1.msra.mxu0 0.0
      %1660 = vmatprep.subr.mxu0 0.0
      %1661 = vmatpush1.msra.mxu0 0.0
      %1662 = vmatprep.subr.mxu0 0.0
      %1663 = vmatpush1.msra.mxu0 0.0
      %1664 = vmatprep.subr.mxu0 0.0
      %1665 = vmatpush1.msra.mxu0 0.0
      %1666 = vmatprep.subr.mxu0 0.0
      %1667 = vmatpush1.msra.mxu0 %v1634
      %1668 = vmatprep.subr.mxu0 0.0
      %1669 = vmatpush2.msra.mxu0 0.0
      %1670 = vmatprep.subr.mxu0 0.0
      %1671 = vmatpush2.msra.mxu0 0.0
      %1672 = vmatprep.subr.mxu0 0.0
      %1673 = vmatpush2.msra.mxu0 0.0
      %1674 = vmatprep.subr.mxu0 0.0
      %1675 = vmatpush2.msra.mxu0 0.0
      %1676 = vmatprep.subr.mxu0 0.0
      %1677 = vmatpush2.msra.mxu0 0.0
      %1678 = vmatprep.subr.mxu0 0.0
      %1679 = vmatpush2.msra.mxu0 0.0
      %1680 = vmatprep.subr.mxu0 0.0
      %1681 = vmatpush2.msra.mxu0 0.0
      %1682 = vmatprep.subr.mxu0 0.0
      %1683 = vmatpush2.msra.mxu0 0.0
      %1684 = vmatprep.subr.mxu0 0.0
      %1685 = vmatpush2.msra.mxu0 0.0
      %1686 = vmatprep.subr.mxu0 0.0
      %1687 = vmatpush2.msra.mxu0 0.0
      %1688 = vmatprep.subr.mxu0 0.0
      %1689 = vmatpush2.msra.mxu0 0.0
      %1690 = vmatprep.subr.mxu0 0.0
      %1691 = vmatpush2.msra.mxu0 0.0
      %1692 = vmatprep.subr.mxu0 0.0
      %1693 = vmatpush2.msra.mxu0 0.0
      %1694 = vmatprep.subr.mxu0 0.0
      %1695 = vmatpush2.msra.mxu0 0.0
      %1696 = vmatprep.subr.mxu0 0.0
      %1697 = vmatpush2.msra.mxu0 0.0
      %1698 = vmatprep.subr.mxu0 0.0
      %1699 = vmatpush2.msra.mxu0 0.0
      %1700 = vmatprep.mubr.f32.mxu0 0.0
      %1701 = vmatmul.mubr.f32.gmra.mxu0 %v1630
      %v1702 = vpop.f32.mrf.mxu0
      %v1703 = vadd.f32 0.0, %v1702
      %v1704 = vpop.f32.mrf.mxu0
      %1705 = vdwg.mxu0
      %v1706 = vxor.u32 %v1703, 2147483648
      %v1707 = vmul.f32 %v1706, 1.442695
      %v1708 = vpow.pop %v1707
      %v1709 = vadd.f32 %v1708, 1.0
      %v1710 = vrcp.pop %v1709
      %v1711 = vmul.f32 1.0, %v1710
      %v1712 = vld [vmem:[%s7] sm:$0xff]
      %v1713 = vld [vmem:[%s7 + $0x8] sm:$0xff]
      %v1714 = vld [vmem:[%s7 + $0x10] sm:$0xff]
      %v1715 = vld [vmem:[%s7 + $0x18] sm:$0xff]
      %v1717 = vsel %vm956, %v1711, 0
      %1719 = vmatprep.subr.mxu0 0.0
      %1720 = vmatpush1.msra.mxu0 0.0
      %1721 = vmatprep.subr.mxu0 0.0
      %1722 = vmatpush1.msra.mxu0 0.0
      %1723 = vmatprep.subr.mxu0 0.0
      %1724 = vmatpush1.msra.mxu0 0.0
      %1725 = vmatprep.subr.mxu0 0.0
      %1726 = vmatpush1.msra.mxu0 0.0
      %1727 = vmatprep.subr.mxu0 0.0
      %1728 = vmatpush1.msra.mxu0 0.0
      %1729 = vmatprep.subr.mxu0 0.0
      %1730 = vmatpush1.msra.mxu0 0.0
      %1731 = vmatprep.subr.mxu0 0.0
      %1732 = vmatpush1.msra.mxu0 0.0
      %1733 = vmatprep.subr.mxu0 0.0
      %1734 = vmatpush1.msra.mxu0 0.0
      %1735 = vmatprep.subr.mxu0 0.0
      %1736 = vmatpush1.msra.mxu0 0.0
      %1737 = vmatprep.subr.mxu0 0.0
      %1738 = vmatpush1.msra.mxu0 0.0
      %1739 = vmatprep.subr.mxu0 0.0
      %1740 = vmatpush1.msra.mxu0 0.0
      %1741 = vmatprep.subr.mxu0 0.0
      %1742 = vmatpush1.msra.mxu0 0.0
      %1743 = vmatprep.subr.mxu0 0.0
      %1744 = vmatpush1.msra.mxu0 0.0
      %1745 = vmatprep.subr.mxu0 0.0
      %1746 = vmatpush1.msra.mxu0 0.0
      %1747 = vmatprep.subr.mxu0 %v1715
      %1748 = vmatpush1.msra.mxu0 %v1714
      %1749 = vmatprep.subr.mxu0 %v1713
      %1750 = vmatpush1.msra.mxu0 %v1712
      %1751 = vmatprep.subr.mxu0 0.0
      %1752 = vmatpush2.msra.mxu0 0.0
      %1753 = vmatprep.subr.mxu0 0.0
      %1754 = vmatpush2.msra.mxu0 0.0
      %1755 = vmatprep.subr.mxu0 0.0
      %1756 = vmatpush2.msra.mxu0 0.0
      %1757 = vmatprep.subr.mxu0 0.0
      %1758 = vmatpush2.msra.mxu0 0.0
      %1759 = vmatprep.subr.mxu0 0.0
      %1760 = vmatpush2.msra.mxu0 0.0
      %1761 = vmatprep.subr.mxu0 0.0
      %1762 = vmatpush2.msra.mxu0 0.0
      %1763 = vmatprep.subr.mxu0 0.0
      %1764 = vmatpush2.msra.mxu0 0.0
      %1765 = vmatprep.subr.mxu0 0.0
      %1766 = vmatpush2.msra.mxu0 0.0
      %1767 = vmatprep.subr.mxu0 0.0
      %1768 = vmatpush2.msra.mxu0 0.0
      %1769 = vmatprep.subr.mxu0 0.0
      %1770 = vmatpush2.msra.mxu0 0.0
      %1771 = vmatprep.subr.mxu0 0.0
      %1772 = vmatpush2.msra.mxu0 0.0
      %1773 = vmatprep.subr.mxu0 0.0
      %1774 = vmatpush2.msra.mxu0 0.0
      %1775 = vmatprep.subr.mxu0 0.0
      %1776 = vmatpush2.msra.mxu0 0.0
      %1777 = vmatprep.subr.mxu0 0.0
      %1778 = vmatpush2.msra.mxu0 0.0
      %1779 = vmatprep.subr.mxu0 0.0
      %1780 = vmatpush2.msra.mxu0 0.0
      %1781 = vmatprep.subr.mxu0 0.0
      %1782 = vmatpush2.msra.mxu0 0.0
      %1783 = vmatprep.mubr.f32.mxu0 0.0
      %1784 = vmatmul.mubr.f32.gmra.mxu0 %v1717
      %v1785 = vpop.f32.mrf.mxu0
      %v1786 = vadd.f32 0.0, %v1785
      %v1787 = vpop.f32.mrf.mxu0
      %v1788 = vadd.f32 0.0, %v1787
      %1789 = vdwg.mxu0
      %v1790 = vlaneseq
      %v1791 = vshrl.u32 %v1790, 7
      %v1792 = vsub.s32 0, %v1791
      %v1793 = vrot.slane %v1786, %v1792
      %v1794 = vlaneseq
      %v1795 = vshrl.u32 %v1794, 7
      %v1796 = vsub.s32 0, %v1795
      %v1797 = vrot.slane %v1788, %v1796
      %v1798 = vmul.f32 %v1430, %v1793
      %v1799 = vmul.f32 %v1431, %v1797
      %v1800 = vmul.f32 %v1432, %v1793
      %v1801 = vmul.f32 %v1433, %v1797
      %v1802 = vadd.f32 %v1798, %v380
      %v1803 = vadd.f32 %v1799, %v381
      %v1804 = vadd.f32 %v1800, %v382
      %v1805 = vadd.f32 %v1801, %v383
      %1806 = vst [vmem:[%s379] sm:$0xff] %v1802
      %1807 = vst [vmem:[%s379 + $0x8] sm:$0xff] %v1803
      %1808 = vst [vmem:[%s379 + $0x10] sm:$0xff] %v1804
      %1809 = vst [vmem:[%s379 + $0x18] sm:$0xff] %v1805
      %p1810 = scmp.lt.s32.totalorder %s21, 1
      %s1811 = scalar_select %p1810, %s21, 1
      %s1812 = smul.addr %s1811, 4
      %s1813 = smul.addr %s1812, 8
      %s1814 = scalar_lea.vmem %s10, %s1813
      // Predicated region
      $region61: #{s2fb2_forward.1} parent=59 // pred_check
        %p1815 = pneg %p259
      $region62: #{s2fb2_forward.1} parent=59 // pred_check_branch
        %1817 = sbr.rel (%p1815) target = $region64
      $region63: #{s2fb2_forward.1} parent=59 // pred_region
        _
      $region64: #{s2fb2_forward.1} parent=59 // pred_fallthru
        _
    $region60: #{s2fb2_forward.1} parent=5 // pred_fallthru
      _
    %p1818 = scmp.le.s32.totalorder 2, %s16
    // Predicated region
    $region65: #{s2fb2_forward.1} parent=5 // pred_check
      %p1819 = pneg %p1818
    $region66: #{s2fb2_forward.1} parent=5 // pred_check_branch
      %1821 = sbr.rel (%p1819) target = $region68
    $region67: #{s2fb2_forward.1} parent=5 // pred_region
      %s1822 = ssub.s32 %s16, 2
      // Predicated region
      $region69: #{s2fb2_forward.1} parent=67 // pred_check
        %p1823 = pneg %p265
      $region70: #{s2fb2_forward.1} parent=67 // pred_check_branch
        %1825 = sbr.rel (%p1823) target = $region72
      $region71: #{s2fb2_forward.1} parent=67 // pred_region
        %p1826 = scmp.lt.s32.totalorder %s22, 1
        %s1827 = scalar_select %p1826, %s22, 1
        %s1828 = smul.addr %s1827, 4
        %s1829 = smul.addr %s1828, 8
        %s1830 = scalar_lea.vmem %s10, %s1829
      $region72: #{s2fb2_forward.1} parent=67 // pred_fallthru
        _
    $region68: #{s2fb2_forward.1} parent=5 // pred_fallthru
      _
  $region6: #{s2fb2_forward.1} parent=0 // loop_footer
    %s20 = sadd.s32 1, %s16
  $region7: #{s2fb2_forward.1} parent=0 // loop_footer_branch
    %15 = sbr.rel target = $region3
  $region8: #{s2fb2_forward.1} parent=0 // loop_exit
    _

</llo_original>
